<compile_context>
chip_gen: v5e
topology: v5e:2x2
jax: 0.10.0
libtpu: 0.0.40
codegen_flags: <defaults>
</compile_context>

<pallas_src>
import functools

import jax
import jax.numpy as jnp
from jax import lax
from jax.experimental import pallas as pl
from jax.experimental.pallas import tpu as pltpu


def _round_up(x, m):
    return ((x + m - 1) // m) * m


def _linear_interleaved_kernel(w_ref, b_ref, x_ref, y_ref):
    """One (sb, 128) tile of the interleaved layout.

    w_ref : SMEM (4,) f32  -- [w00, w01, w10, w11] (row-major nn.Linear weight)
    b_ref : SMEM (2,) f32
    x_ref : VMEM (sb, 128) -- lane 2j   holds x0 of batch element (row*64 + j)
                              lane 2j+1 holds x1 of the same batch element
    y_ref : VMEM (sb, 128) -- same interleaving for (y0, y1)
    """
    x = x_ref[...].astype(jnp.float32)                      # (sb, 128)

    # Per-lane parity mask, built once at (1, 128) and broadcast.
    lane = lax.broadcasted_iota(jnp.int32, (1, 128), 1)
    is_even = (lane % 2) == 0                                # feature-0 lanes

    # Pair every lane with its partner feature (rolls land on the XLU):
    #   even lane i needs x[i+1]  -> circular roll by -1 (== +127)
    #   odd  lane i needs x[i-1]  -> roll by +1
    partner = jnp.where(is_even,
                        pltpu.roll(x, 127, axis=1),
                        pltpu.roll(x, 1, axis=1))

    # Lane-parity-selected weights / bias (scalars broadcast from SMEM).
    a = jnp.where(is_even, w_ref[0], w_ref[3])               # w00 / w11
    c = jnp.where(is_even, w_ref[1], w_ref[2])               # w01 / w10
    bvec = jnp.where(is_even, b_ref[0], b_ref[1])            # b0  / b1

    y_ref[...] = (a * x + c * partner + bvec).astype(y_ref.dtype)


@functools.partial(jax.jit, static_argnames=("block_rows", "min_pallas_batch"))
def linear_regression_forward(x, weight, bias, *, block_rows=4096,
                              min_pallas_batch=4096):
    """y = x @ weight.T + bias  (PyTorch nn.Linear(2, 2) forward)."""
    B, in_f = x.shape
    out_f, _ = weight.shape
    assert in_f == 2 and out_f == 2, "kernel is specialized for nn.Linear(2, 2)"

    # Fast path: small batches (or batches that don't fill whole 128-lane
    # interleaved rows) are cheapest as a fused XLA op.
    if B < min_pallas_batch or B % 64 != 0:
        y = (jnp.dot(x.astype(jnp.float32), weight.astype(jnp.float32).T,
                     precision=lax.Precision.HIGHEST)
             + bias.astype(jnp.float32))
        return y.astype(x.dtype)

    rows = B // 64                        # interleaved rows of 128 lanes
    # Tile: multiple of 8 sublanes, ~2 MiB payload by default, and at least
    # two grid blocks so both v7x TensorCores get work.
    sb = _round_up(max(block_rows, 8), 8)
    sb = min(sb, _round_up(pl.cdiv(rows, 2), 8))
    grid = (pl.cdiv(rows, sb),)

    x_il = x.reshape(rows, 128)                         # contiguous view of (B, 2)
    w_flat = weight.astype(jnp.float32).reshape(-1)     # (4,)  -> SMEM
    b_flat = bias.astype(jnp.float32)                   # (2,)  -> SMEM

    y_il = pl.pallas_call(
        _linear_interleaved_kernel,
        out_shape=jax.ShapeDtypeStruct((rows, 128), x.dtype),
        grid_spec=pltpu.PrefetchScalarGridSpec(
            num_scalar_prefetch=0,
            grid=grid,
            in_specs=[
                pl.BlockSpec(memory_space=pltpu.MemorySpace.SMEM),  # weights
                pl.BlockSpec(memory_space=pltpu.MemorySpace.SMEM),  # bias
                pl.BlockSpec((sb, 128), lambda i: (i, 0)),          # x tile
            ],
            out_specs=pl.BlockSpec((sb, 128), lambda i: (i, 0)),    # y tile
        ),
        compiler_params=pltpu.CompilerParams(
            dimension_semantics=("parallel",),
            vmem_limit_bytes=32 * 1024 * 1024,
        ),
    )(w_flat, b_flat, x_il)

    return y_il.reshape(B, 2)             # view back to (B, out_features)


if __name__ == "__main__":
    key = jax.random.PRNGKey(0)
    k_w, k_b, k1, k2, k3, k4 = jax.random.split(key, 6)

    weight = jax.random.normal(k_w, (2, 2), dtype=jnp.float32)
    bias = jax.random.normal(k_b, (2,), dtype=jnp.float32)

    def ref_fn(xv):  # exact f32 elementwise reference (same op order as kernel)
        x0, x1 = xv[:, 0:1], xv[:, 1:2]
        y0 = x0 * weight[0, 0] + x1 * weight[0, 1] + bias[0]
        y1 = x0 * weight[1, 0] + x1 * weight[1, 1] + bias[1]
        return jnp.concatenate([y0, y1], axis=-1)

    # 1) Pallas path: B multiple of 64, two grid blocks (megacore-friendly).
    x1 = jax.random.normal(k1, (131072, 2), dtype=jnp.float32)
    y1 = jax.block_until_ready(linear_regression_forward(x1, weight, bias))
    assert y1.shape == (131072, 2)
    assert jnp.allclose(y1, ref_fn(x1), atol=1e-5, rtol=1e-5)

    # 2) Pallas path with a ragged last grid block (rows not divisible by sb).
    x2 = jax.random.normal(k2, (64000, 2), dtype=jnp.float32)
    y2 = jax.block_until_ready(
        linear_regression_forward(x2, weight, bias, block_rows=512))
    assert y2.shape == (64000, 2)
    assert jnp.allclose(y2, ref_fn(x2), atol=1e-5, rtol=1e-5)

    # 3) Small-batch fast path (fused XLA, no pallas_call overhead).
    x3 = jax.random.normal(k3, (8, 2), dtype=jnp.float32)
    y3 = jax.block_until_ready(linear_regression_forward(x3, weight, bias))
    assert jnp.allclose(y3, ref_fn(x3), atol=1e-5, rtol=1e-5)

    # 4) Non-multiple-of-64 batch also routes to the fused fast path.
    x4 = jax.random.normal(k4, (300, 2), dtype=jnp.float32)
    y4 = jax.block_until_ready(linear_regression_forward(x4, weight, bias))
    assert jnp.allclose(y4, ref_fn(x4), atol=1e-5, rtol=1e-5)

    print("KERNEL_OK")
</pallas_src>

<mosaic_0001>
module attributes {stable_mosaic.version = 11 : i64} {
  func.func @_linear_interleaved_kernel(%arg0: i32, %arg1: memref<4xf32, #tpu.memory_space<smem>>, %arg2: memref<2xf32, #tpu.memory_space<smem>>, %arg3: memref<1024x128xf32, #tpu.memory_space<vmem>>, %arg4: memref<1024x128xf32, #tpu.memory_space<vmem>>) attributes {dimension_semantics = [#tpu.dimension_semantics<parallel>], iteration_bounds = array<i64: 2>, scalar_prefetch = 0 : i64, scratch_operands = 0 : i64, tpu.core_type = #tpu.core_type<tc>, window_params = [{transform_indices = @transform_0, window_bounds = array<i64: 4>}, {transform_indices = @transform_1, window_bounds = array<i64: 2>}, {transform_indices = @transform_2, window_bounds = array<i64: 1024, 128>}, {transform_indices = @transform_3, window_bounds = array<i64: 1024, 128>}]} {
    %c0 = arith.constant 0 : index
    %c0_0 = arith.constant 0 : index
    %0 = vector.load %arg3[%c0, %c0_0] : memref<1024x128xf32, #tpu.memory_space<vmem>>, vector<1024x128xf32>
    %1 = tpu.iota {dimensions = array<i32: 1>} : vector<1x128xi32>
    %c2_i32 = arith.constant 2 : i32
    %c0_i32 = arith.constant 0 : i32
    %2 = arith.cmpi eq, %c2_i32, %c0_i32 : i32
    %c1_i32 = arith.constant 1 : i32
    %3 = arith.select %2, %c1_i32, %c2_i32 : i32
    %4 = vector.broadcast %3 : i32 to vector<1x128xi32>
    %5 = arith.remsi %1, %4 : vector<1x128xi32>
    %c0_i32_1 = arith.constant 0 : i32
    %6 = vector.broadcast %c0_i32_1 : i32 to vector<1x128xi32>
    %7 = arith.cmpi ne, %5, %6 : vector<1x128xi32>
    %c0_i32_2 = arith.constant 0 : i32
    %8 = vector.broadcast %c0_i32_2 : i32 to vector<1x128xi32>
    %9 = arith.cmpi slt, %5, %8 : vector<1x128xi32>
    %c0_i32_3 = arith.constant 0 : i32
    %10 = arith.cmpi slt, %3, %c0_i32_3 : i32
    %11 = vector.broadcast %10 : i1 to vector<1x128xi1>
    %12 = vector.broadcast %11 : vector<1x128xi1> to vector<1x128xi1>
    %13 = arith.xori %9, %12 : vector<1x128xi1>
    %14 = arith.andi %13, %7 : vector<1x128xi1>
    %15 = vector.broadcast %3 : i32 to vector<1x128xi32>
    %16 = arith.addi %5, %15 : vector<1x128xi32>
    %17 = arith.select %14, %16, %5 : vector<1x128xi1>, vector<1x128xi32>
    %c0_i32_4 = arith.constant 0 : i32
    %18 = vector.broadcast %c0_i32_4 : i32 to vector<1x128xi32>
    %19 = arith.cmpi eq, %17, %18 : vector<1x128xi32>
    %c127_i32 = arith.constant 127 : i32
    %20 = tpu.dynamic_rotate %0 by %c127_i32 dim 1 : vector<1024x128xf32>, i32 -> vector<1024x128xf32>
    %c1_i32_5 = arith.constant 1 : i32
    %21 = tpu.dynamic_rotate %0 by %c1_i32_5 dim 1 : vector<1024x128xf32>, i32 -> vector<1024x128xf32>
    %22 = vector.shape_cast %19 : vector<1x128xi1> to vector<1x128xi1>
    %23 = vector.broadcast %22 : vector<1x128xi1> to vector<1024x128xi1>
    %24 = arith.select %23, %20, %21 : vector<1024x128xi1>, vector<1024x128xf32>
    %c0_6 = arith.constant 0 : index
    %25 = memref.load %arg1[%c0_6] : memref<4xf32, #tpu.memory_space<smem>>
    %c3 = arith.constant 3 : index
    %26 = memref.load %arg1[%c3] : memref<4xf32, #tpu.memory_space<smem>>
    %27 = vector.broadcast %25 : f32 to vector<1x128xf32>
    %28 = vector.broadcast %26 : f32 to vector<1x128xf32>
    %29 = arith.select %19, %27, %28 : vector<1x128xi1>, vector<1x128xf32>
    %c1 = arith.constant 1 : index
    %30 = memref.load %arg1[%c1] : memref<4xf32, #tpu.memory_space<smem>>
    %c2 = arith.constant 2 : index
    %31 = memref.load %arg1[%c2] : memref<4xf32, #tpu.memory_space<smem>>
    %32 = vector.broadcast %30 : f32 to vector<1x128xf32>
    %33 = vector.broadcast %31 : f32 to vector<1x128xf32>
    %34 = arith.select %19, %32, %33 : vector<1x128xi1>, vector<1x128xf32>
    %c0_7 = arith.constant 0 : index
    %35 = memref.load %arg2[%c0_7] : memref<2xf32, #tpu.memory_space<smem>>
    %c1_8 = arith.constant 1 : index
    %36 = memref.load %arg2[%c1_8] : memref<2xf32, #tpu.memory_space<smem>>
    %37 = vector.broadcast %35 : f32 to vector<1x128xf32>
    %38 = vector.broadcast %36 : f32 to vector<1x128xf32>
    %39 = arith.select %19, %37, %38 : vector<1x128xi1>, vector<1x128xf32>
    %40 = vector.broadcast %29 : vector<1x128xf32> to vector<1024x128xf32>
    %41 = arith.mulf %40, %0 : vector<1024x128xf32>
    %42 = vector.broadcast %34 : vector<1x128xf32> to vector<1024x128xf32>
    %43 = arith.mulf %42, %24 : vector<1024x128xf32>
    %44 = arith.addf %41, %43 : vector<1024x128xf32>
    %45 = vector.broadcast %39 : vector<1x128xf32> to vector<1024x128xf32>
    %46 = arith.addf %44, %45 : vector<1024x128xf32>
    %c0_9 = arith.constant 0 : index
    %c0_10 = arith.constant 0 : index
    %47 = vector.load %arg4[%c0_9, %c0_10] : memref<1024x128xf32, #tpu.memory_space<vmem>>, vector<1024x128xf32>
    tpu.vector_store %arg4[%c0_9, %c0_10], %46 {strides = array<i32>} : memref<1024x128xf32, #tpu.memory_space<vmem>>, vector<1024x128xf32>,
    return
  }
  func.func @transform_0(%arg0: i32) -> i32 {
    %c0_i32 = arith.constant 0 : i32
    %c0_i32_0 = arith.constant 0 : i32
    return %c0_i32 : i32
  }
  func.func @transform_1(%arg0: i32) -> i32 {
    %c0_i32 = arith.constant 0 : i32
    %c0_i32_0 = arith.constant 0 : i32
    return %c0_i32 : i32
  }
  func.func @transform_2(%arg0: i32) -> (i32, i32) {
    %c0_i32 = arith.constant 0 : i32
    %c0_i32_0 = arith.constant 0 : i32
    return %arg0, %c0_i32 : i32, i32
  }
  func.func @transform_3(%arg0: i32) -> (i32, i32) {
    %c0_i32 = arith.constant 0 : i32
    %c0_i32_0 = arith.constant 0 : i32
    return %arg0, %c0_i32 : i32, i32
  }
}

</mosaic_0001>

<llo_original>
// kernel: linear_regression_forward.1
$region0: #{linear_regression_forward.1}
  #allocation0 [shape = 'u32[]', space=smem, size = 0x4, offset = 0x4, fixed_abs, tag = 'smem constant byte address 0x4 - core index']
  #allocation1 [shape = 'u32[72,128]{1,0:T(1,128)}', space=vmem, size = 0x9000, scoped, tag = 'internal scratch']
  %s0 = inlined_call_operand.vmem [shape: f32[4], index: 0, kind: input, shape index: {}]
  %s1 = inlined_call_operand.vmem [shape: f32[2], index: 1, kind: input, shape index: {}]
  %s2 = inlined_call_operand.vmem [shape: f32[2048,128], index: 2, kind: input, shape index: {}]
  %s3 = inlined_call_operand.vmem [shape: f32[2048,128], index: 3, kind: output, shape index: {}]
  %s4 = sld [smem:[#allocation0]]
  $region53: #{linear_regression_forward.1} parent=0
    _
  %s6 = ssub.s32 1, %s4
  %s7 = scalar_select 0, %s6, %s4
  $region1: #{linear_regression_forward.1} parent=0
    #allocation2 [shape = 'u8[512]{0}', space=smem, size = 0x200, scoped, tag = 'input window, operand 0, single buffered']
    #allocation3 [shape = 's32[2]{0}', space=sflag, size = 0x8, scoped, tag = 'scoped memory for linear_regression_forward.1']
    #allocation4 [shape = 'u8[512]{0}', space=smem, size = 0x200, scoped, tag = 'input window, operand 1, single buffered']
    #allocation5 [shape = 's32[1]{0}', space=sflag, size = 0x4, scoped, tag = 'scoped memory for linear_regression_forward.1']
    %8 = vsyncpa [#allocation3], 0
    %9 = vsyncpa [#allocation5], 0
    loop: start=0, step=1, limit=4
    $region2: #{linear_regression_forward.1} parent=1 // loop_pre_header
      _
    $region3: #{linear_regression_forward.1} parent=1 // loop_header
      %s11 = sphi 0, %s15
      %p12 = scmp.ge.s32.totalorder %s11, 4
      %s19 = sphi 0, %s19
      %s21 = sphi 0, %s19
      %s22 = sphi 0, %s21
      %s36 = sphi 0, %s22
      %s40 = sphi 0, %s40
      %s42 = sphi 0, %s40
      %s43 = sphi 0, %s42
      %s57 = sphi 0, %s43
      %s63 = sphi 0, %s65
      %s66 = sphi 0, %s63
      %s67 = sphi 0, %s66
      %s83 = sphi 0, %s67
      %s89 = sphi 0, %s91
      %s92 = sphi 0, %s89
      %s93 = sphi 0, %s92
      %s109 = sphi 0, %s93
    $region4: #{linear_regression_forward.1} parent=1 // loop_header_branch
      %14 = sbr.rel (%p12) target = $region8
    $region5: #{linear_regression_forward.1} parent=1 // loop_body
      %s16 = ssub.s32 %s11, 1
      %s17 = ssub.s32 %s11, 2
      %s18 = sadd.s32 %s11, 1
      %s20 = sadd.s32 %s19, 1
      %p23 = scmp.eq.s32.totalorder %s11, 1
      %p24 = scmp.ne.s32.totalorder %s19, %s21
      %p25 = scmp.eq.s32.totalorder %s11, 0
      %p26 = por %p24, %p25
      %p27 = scmp.ne.s32.totalorder %s19, %s21
      %p28 = scmp.eq.s32.totalorder %s16, 1
      %p29 = por %p27, %p28
      %p30 = scmp.ne.s32.totalorder %s21, %s22
      %p31 = scmp.eq.s32.totalorder %s16, 0
      %p32 = por %p30, %p31
      %p33 = scmp.ne.s32.totalorder %s21, %s22
      %p34 = scmp.eq.s32.totalorder %s17, 1
      %p35 = por %p33, %p34
      %p37 = scmp.ne.s32.totalorder %s22, %s36
      %p38 = scmp.eq.s32.totalorder %s17, 0
      %p39 = por %p37, %p38
      %s41 = sadd.s32 %s40, 1
      %p44 = scmp.eq.s32.totalorder %s11, 1
      %p45 = scmp.ne.s32.totalorder %s40, %s42
      %p46 = scmp.eq.s32.totalorder %s11, 0
      %p47 = por %p45, %p46
      %p48 = scmp.ne.s32.totalorder %s40, %s42
      %p49 = scmp.eq.s32.totalorder %s16, 1
      %p50 = por %p48, %p49
      %p51 = scmp.ne.s32.totalorder %s42, %s43
      %p52 = scmp.eq.s32.totalorder %s16, 0
      %p53 = por %p51, %p52
      %p54 = scmp.ne.s32.totalorder %s42, %s43
      %p55 = scmp.eq.s32.totalorder %s17, 1
      %p56 = por %p54, %p55
      %p58 = scmp.ne.s32.totalorder %s43, %s57
      %p59 = scmp.eq.s32.totalorder %s17, 0
      %p60 = por %p58, %p59
      %s61 = ssub.s32 %s11, %s18
      %p62 = scmp.eq.s32.totalorder %s61, 0
      %s64 = sadd.s32 %s63, 1
      %s65 = scalar_select %p62, %s63, %s64
      %p68 = pneg %p62
      %p69 = scmp.eq.s32.totalorder %s11, 1
      %p70 = por %p68, %p69
      %p71 = scmp.ne.s32.totalorder %s63, %s66
      %p72 = scmp.eq.s32.totalorder %s11, 0
      %p73 = por %p71, %p72
      %p74 = scmp.ne.s32.totalorder %s63, %s66
      %p75 = scmp.eq.s32.totalorder %s16, 1
      %p76 = por %p74, %p75
      %p77 = scmp.ne.s32.totalorder %s66, %s67
      %p78 = scmp.eq.s32.totalorder %s16, 0
      %p79 = por %p77, %p78
      %p80 = scmp.ne.s32.totalorder %s66, %s67
      %p81 = scmp.eq.s32.totalorder %s17, 1
      %p82 = por %p80, %p81
      %p84 = scmp.ne.s32.totalorder %s67, %s83
      %p85 = scmp.eq.s32.totalorder %s17, 0
      %p86 = por %p84, %p85
      %s87 = ssub.s32 %s11, %s18
      %p88 = scmp.eq.s32.totalorder %s87, 0
      %s90 = sadd.s32 %s89, 1
      %s91 = scalar_select %p88, %s89, %s90
      %p94 = pneg %p88
      %p95 = scmp.eq.s32.totalorder %s11, 1
      %p96 = por %p94, %p95
      %p97 = scmp.ne.s32.totalorder %s89, %s92
      %p98 = scmp.eq.s32.totalorder %s11, 0
      %p99 = por %p97, %p98
      %p100 = scmp.ne.s32.totalorder %s89, %s92
      %p101 = scmp.eq.s32.totalorder %s16, 1
      %p102 = por %p100, %p101
      %p103 = scmp.ne.s32.totalorder %s92, %s93
      %p104 = scmp.eq.s32.totalorder %s16, 0
      %p105 = por %p103, %p104
      %p106 = scmp.ne.s32.totalorder %s92, %s93
      %p107 = scmp.eq.s32.totalorder %s17, 1
      %p108 = por %p106, %p107
      %p110 = scmp.ne.s32.totalorder %s93, %s109
      %p111 = scmp.eq.s32.totalorder %s17, 0
      %p112 = por %p110, %p111
      %p113 = scmp.le.s32.totalorder 1, %s11
      %p114 = scmp.lt.s32.totalorder %s11, 3
      %p115 = pnand %p113, %p114
      %p116 = pneg %p115
      // Predicated region
      $region9: #{linear_regression_forward.1} parent=5 // pred_check
        _
      $region10: #{linear_regression_forward.1} parent=5 // pred_check_branch
        %118 = sbr.rel (%p115) target = $region12
      $region11: #{linear_regression_forward.1} parent=5 // pred_region
        %s119 = ssub.s32 %s11, 1
        // Predicated region
        $region13: #{linear_regression_forward.1} parent=11 // pred_check
          %p120 = pneg %p32
        $region14: #{linear_regression_forward.1} parent=11 // pred_check_branch
          %122 = sbr.rel (%p120) target = $region16
        $region15: #{linear_regression_forward.1} parent=11 // pred_region
          %124 = vsyncadd [#allocation3], 0
          %s126 = sshll.u32 %s0, 4
          %s127 = int_to_ptr.vmem [resolvable:$true] %s126
          %129 = dma.vmem_to_smem %s127, 16, [#allocation2], [#allocation3]
        $region16: #{linear_regression_forward.1} parent=11 // pred_fallthru
          _
        // Predicated region
        $region17: #{linear_regression_forward.1} parent=11 // pred_check
          %p130 = pneg %p53
        $region18: #{linear_regression_forward.1} parent=11 // pred_check_branch
          %132 = sbr.rel (%p130) target = $region20
        $region19: #{linear_regression_forward.1} parent=11 // pred_region
          %134 = vsyncadd [#allocation5], 0
          %s136 = sshll.u32 %s1, 4
          %s137 = int_to_ptr.vmem [resolvable:$true] %s136
          %139 = dma.vmem_to_smem %s137, 16, [#allocation4], [#allocation5]
        $region20: #{linear_regression_forward.1} parent=11 // pred_fallthru
          _
      $region12: #{linear_regression_forward.1} parent=5 // pred_fallthru
        _
      %p140 = scmp.lt.s32.totalorder %s11, 2
      // Predicated region
      $region21: #{linear_regression_forward.1} parent=5 // pred_check
        %p141 = pneg %p140
      $region22: #{linear_regression_forward.1} parent=5 // pred_check_branch
        %143 = sbr.rel (%p141) target = $region24
      $region23: #{linear_regression_forward.1} parent=5 // pred_region
        // Predicated region
        $region25: #{linear_regression_forward.1} parent=23 // pred_check
          %p144 = pneg %p73
        $region26: #{linear_regression_forward.1} parent=23 // pred_check_branch
          %146 = sbr.rel (%p144) target = $region28
        $region27: #{linear_regression_forward.1} parent=23 // pred_region
          %s147 = smul.u32 128, %s11
          %p148 = scmp.lt.s32.totalorder %s147, 255
          %s149 = scalar_select %p148, %s147, 255
          %s150 = smul.addr %s149, 8
          %s151 = scalar_lea.vmem %s2, %s150
          %s152 = smul.u32 128, %s11
        $region28: #{linear_regression_forward.1} parent=23 // pred_fallthru
          _
      $region24: #{linear_regression_forward.1} parent=5 // pred_fallthru
        _
      %p153 = scmp.le.s32.totalorder 1, %s11
      %p154 = scmp.lt.s32.totalorder %s11, 3
      %p155 = pnand %p153, %p154
      %p156 = pneg %p155
      // Predicated region
      $region29: #{linear_regression_forward.1} parent=5 // pred_check
        _
      $region30: #{linear_regression_forward.1} parent=5 // pred_check_branch
        %158 = sbr.rel (%p155) target = $region32
      $region31: #{linear_regression_forward.1} parent=5 // pred_region
        %s159 = ssub.s32 %s11, 1
        // Predicated region
        $region33: #{linear_regression_forward.1} parent=31 // pred_check
          %p160 = pneg %p32
        $region34: #{linear_regression_forward.1} parent=31 // pred_check_branch
          %162 = sbr.rel (%p160) target = $region36
        $region35: #{linear_regression_forward.1} parent=31 // pred_region
          %164 = dma.done [#allocation3], 16
        $region36: #{linear_regression_forward.1} parent=31 // pred_fallthru
          _
        // Predicated region
        $region37: #{linear_regression_forward.1} parent=31 // pred_check
          %p165 = pneg %p53
        $region38: #{linear_regression_forward.1} parent=31 // pred_check_branch
          %167 = sbr.rel (%p165) target = $region40
        $region39: #{linear_regression_forward.1} parent=31 // pred_region
          %169 = dma.done [#allocation5], 16
        $region40: #{linear_regression_forward.1} parent=31 // pred_fallthru
          _
        %170 = sfence
        %p171 = pneg %p32
        %p172 = pneg %p29
        %p173 = pneg %p53
        %p174 = pneg %p50
        %s175 = smul.u32 128, %s16
        %p176 = scmp.lt.s32.totalorder %s175, 255
        %s177 = scalar_select %p176, %s175, 255
        %s178 = smul.addr %s177, 8
        %s179 = scalar_lea.vmem %s2, %s178
        %p180 = pneg %p79
        %p181 = pneg %p76
        %p182 = pneg %p105
        %p183 = pneg %p102
        %s184 = smul.u32 128, %s16
        %p185 = scmp.lt.s32.totalorder %s184, 255
        %s186 = scalar_select %p185, %s184, 255
        %s187 = smul.addr %s186, 8
        %s188 = scalar_lea.vmem %s3, %s187
        %s189 = smul.u32 128, %s16
        %p190 = scmp.lt.s32.totalorder %s189, 255
        %s191 = scalar_select %p190, %s189, 255
        %s192 = smul.addr %s191, 8
        %s193 = scalar_lea.vmem %s2, %s192
        %s194 = smul.u32 128, %s16
        %s195 = smul.u32 128, %s16
        %p196 = scmp.lt.s32.totalorder %s195, 255
        %s197 = scalar_select %p196, %s195, 255
        %s198 = smul.addr %s197, 8
        %s199 = scalar_lea.vmem %s3, %s198
        %s200 = smul.u32 128, %s16
        %v201 = vld [vmem:[%s193] sm:$0xff]
        %v202 = vld [vmem:[%s193 + $0x8] sm:$0xff]
        %v203 = vld [vmem:[%s193 + $0x10] sm:$0xff]
        %v204 = vld [vmem:[%s193 + $0x18] sm:$0xff]
        %v205 = vld [vmem:[%s193 + $0x20] sm:$0xff]
        %v206 = vld [vmem:[%s193 + $0x28] sm:$0xff]
        %v207 = vld [vmem:[%s193 + $0x30] sm:$0xff]
        %v208 = vld [vmem:[%s193 + $0x38] sm:$0xff]
        %v209 = vld [vmem:[%s193 + $0x40] sm:$0xff]
        %v210 = vld [vmem:[%s193 + $0x48] sm:$0xff]
        %v211 = vld [vmem:[%s193 + $0x50] sm:$0xff]
        %v212 = vld [vmem:[%s193 + $0x58] sm:$0xff]
        %v213 = vld [vmem:[%s193 + $0x60] sm:$0xff]
        %v214 = vld [vmem:[%s193 + $0x68] sm:$0xff]
        %v215 = vld [vmem:[%s193 + $0x70] sm:$0xff]
        %v216 = vld [vmem:[%s193 + $0x78] sm:$0xff]
        %v217 = vld [vmem:[%s193 + $0x80] sm:$0xff]
        %v218 = vld [vmem:[%s193 + $0x88] sm:$0xff]
        %v219 = vld [vmem:[%s193 + $0x90] sm:$0xff]
        %v220 = vld [vmem:[%s193 + $0x98] sm:$0xff]
        %v221 = vld [vmem:[%s193 + $0xa0] sm:$0xff]
        %v222 = vld [vmem:[%s193 + $0xa8] sm:$0xff]
        %v223 = vld [vmem:[%s193 + $0xb0] sm:$0xff]
        %v224 = vld [vmem:[%s193 + $0xb8] sm:$0xff]
        %v225 = vld [vmem:[%s193 + $0xc0] sm:$0xff]
        %v226 = vld [vmem:[%s193 + $0xc8] sm:$0xff]
        %v227 = vld [vmem:[%s193 + $0xd0] sm:$0xff]
        %v228 = vld [vmem:[%s193 + $0xd8] sm:$0xff]
        %v229 = vld [vmem:[%s193 + $0xe0] sm:$0xff]
        %v230 = vld [vmem:[%s193 + $0xe8] sm:$0xff]
        %v231 = vld [vmem:[%s193 + $0xf0] sm:$0xff]
        %v232 = vld [vmem:[%s193 + $0xf8] sm:$0xff]
        %v233 = vld [vmem:[%s193 + $0x100] sm:$0xff]
        %v234 = vld [vmem:[%s193 + $0x108] sm:$0xff]
        %v235 = vld [vmem:[%s193 + $0x110] sm:$0xff]
        %v236 = vld [vmem:[%s193 + $0x118] sm:$0xff]
        %v237 = vld [vmem:[%s193 + $0x120] sm:$0xff]
        %v238 = vld [vmem:[%s193 + $0x128] sm:$0xff]
        %v239 = vld [vmem:[%s193 + $0x130] sm:$0xff]
        %v240 = vld [vmem:[%s193 + $0x138] sm:$0xff]
        %v241 = vld [vmem:[%s193 + $0x140] sm:$0xff]
        %v242 = vld [vmem:[%s193 + $0x148] sm:$0xff]
        %v243 = vld [vmem:[%s193 + $0x150] sm:$0xff]
        %v244 = vld [vmem:[%s193 + $0x158] sm:$0xff]
        %v245 = vld [vmem:[%s193 + $0x160] sm:$0xff]
        %v246 = vld [vmem:[%s193 + $0x168] sm:$0xff]
        %v247 = vld [vmem:[%s193 + $0x170] sm:$0xff]
        %v248 = vld [vmem:[%s193 + $0x178] sm:$0xff]
        %v249 = vld [vmem:[%s193 + $0x180] sm:$0xff]
        %v250 = vld [vmem:[%s193 + $0x188] sm:$0xff]
        %v251 = vld [vmem:[%s193 + $0x190] sm:$0xff]
        %v252 = vld [vmem:[%s193 + $0x198] sm:$0xff]
        %v253 = vld [vmem:[%s193 + $0x1a0] sm:$0xff]
        %v254 = vld [vmem:[%s193 + $0x1a8] sm:$0xff]
        %v255 = vld [vmem:[%s193 + $0x1b0] sm:$0xff]
        %v256 = vld [vmem:[%s193 + $0x1b8] sm:$0xff]
        %v257 = vld [vmem:[%s193 + $0x1c0] sm:$0xff]
        %v258 = vld [vmem:[%s193 + $0x1c8] sm:$0xff]
        %v259 = vld [vmem:[%s193 + $0x1d0] sm:$0xff]
        %v260 = vld [vmem:[%s193 + $0x1d8] sm:$0xff]
        %v261 = vld [vmem:[%s193 + $0x1e0] sm:$0xff]
        %v262 = vld [vmem:[%s193 + $0x1e8] sm:$0xff]
        %v263 = vld [vmem:[%s193 + $0x1f0] sm:$0xff]
        %v264 = vld [vmem:[%s193 + $0x1f8] sm:$0xff]
        %v265 = vld [vmem:[%s193 + $0x200] sm:$0xff]
        %v266 = vld [vmem:[%s193 + $0x208] sm:$0xff]
        %v267 = vld [vmem:[%s193 + $0x210] sm:$0xff]
        %v268 = vld [vmem:[%s193 + $0x218] sm:$0xff]
        %v269 = vld [vmem:[%s193 + $0x220] sm:$0xff]
        %v270 = vld [vmem:[%s193 + $0x228] sm:$0xff]
        %v271 = vld [vmem:[%s193 + $0x230] sm:$0xff]
        %v272 = vld [vmem:[%s193 + $0x238] sm:$0xff]
        %v273 = vld [vmem:[%s193 + $0x240] sm:$0xff]
        %v274 = vld [vmem:[%s193 + $0x248] sm:$0xff]
        %v275 = vld [vmem:[%s193 + $0x250] sm:$0xff]
        %v276 = vld [vmem:[%s193 + $0x258] sm:$0xff]
        %v277 = vld [vmem:[%s193 + $0x260] sm:$0xff]
        %v278 = vld [vmem:[%s193 + $0x268] sm:$0xff]
        %v279 = vld [vmem:[%s193 + $0x270] sm:$0xff]
        %v280 = vld [vmem:[%s193 + $0x278] sm:$0xff]
        %v281 = vld [vmem:[%s193 + $0x280] sm:$0xff]
        %v282 = vld [vmem:[%s193 + $0x288] sm:$0xff]
        %v283 = vld [vmem:[%s193 + $0x290] sm:$0xff]
        %v284 = vld [vmem:[%s193 + $0x298] sm:$0xff]
        %v285 = vld [vmem:[%s193 + $0x2a0] sm:$0xff]
        %v286 = vld [vmem:[%s193 + $0x2a8] sm:$0xff]
        %v287 = vld [vmem:[%s193 + $0x2b0] sm:$0xff]
        %v288 = vld [vmem:[%s193 + $0x2b8] sm:$0xff]
        %v289 = vld [vmem:[%s193 + $0x2c0] sm:$0xff]
        %v290 = vld [vmem:[%s193 + $0x2c8] sm:$0xff]
        %v291 = vld [vmem:[%s193 + $0x2d0] sm:$0xff]
        %v292 = vld [vmem:[%s193 + $0x2d8] sm:$0xff]
        %v293 = vld [vmem:[%s193 + $0x2e0] sm:$0xff]
        %v294 = vld [vmem:[%s193 + $0x2e8] sm:$0xff]
        %v295 = vld [vmem:[%s193 + $0x2f0] sm:$0xff]
        %v296 = vld [vmem:[%s193 + $0x2f8] sm:$0xff]
        %v297 = vld [vmem:[%s193 + $0x300] sm:$0xff]
        %v298 = vld [vmem:[%s193 + $0x308] sm:$0xff]
        %v299 = vld [vmem:[%s193 + $0x310] sm:$0xff]
        %v300 = vld [vmem:[%s193 + $0x318] sm:$0xff]
        %v301 = vld [vmem:[%s193 + $0x320] sm:$0xff]
        %v302 = vld [vmem:[%s193 + $0x328] sm:$0xff]
        %v303 = vld [vmem:[%s193 + $0x330] sm:$0xff]
        %v304 = vld [vmem:[%s193 + $0x338] sm:$0xff]
        %v305 = vld [vmem:[%s193 + $0x340] sm:$0xff]
        %v306 = vld [vmem:[%s193 + $0x348] sm:$0xff]
        %v307 = vld [vmem:[%s193 + $0x350] sm:$0xff]
        %v308 = vld [vmem:[%s193 + $0x358] sm:$0xff]
        %v309 = vld [vmem:[%s193 + $0x360] sm:$0xff]
        %v310 = vld [vmem:[%s193 + $0x368] sm:$0xff]
        %v311 = vld [vmem:[%s193 + $0x370] sm:$0xff]
        %v312 = vld [vmem:[%s193 + $0x378] sm:$0xff]
        %v313 = vld [vmem:[%s193 + $0x380] sm:$0xff]
        %v314 = vld [vmem:[%s193 + $0x388] sm:$0xff]
        %v315 = vld [vmem:[%s193 + $0x390] sm:$0xff]
        %v316 = vld [vmem:[%s193 + $0x398] sm:$0xff]
        %v317 = vld [vmem:[%s193 + $0x3a0] sm:$0xff]
        %v318 = vld [vmem:[%s193 + $0x3a8] sm:$0xff]
        %v319 = vld [vmem:[%s193 + $0x3b0] sm:$0xff]
        %v320 = vld [vmem:[%s193 + $0x3b8] sm:$0xff]
        %v321 = vld [vmem:[%s193 + $0x3c0] sm:$0xff]
        %v322 = vld [vmem:[%s193 + $0x3c8] sm:$0xff]
        %v323 = vld [vmem:[%s193 + $0x3d0] sm:$0xff]
        %v324 = vld [vmem:[%s193 + $0x3d8] sm:$0xff]
        %v325 = vld [vmem:[%s193 + $0x3e0] sm:$0xff]
        %v326 = vld [vmem:[%s193 + $0x3e8] sm:$0xff]
        %v327 = vld [vmem:[%s193 + $0x3f0] sm:$0xff]
        %v328 = vld [vmem:[%s193 + $0x3f8] sm:$0xff]
        %v329 = vlaneseq
        %v330 = vand.u32 %v329, 127
        %vm331 = vcmp.lt.s32.totalorder %v330, 0
        %v332 = vsub.s32 0, %v330
        %v333 = vsel %vm331, %v332, %v330
        %v334 = vshrl.u32 %v333, 1
        %v335 = vand.u32 %v333, 1
        %v336 = vsub.s32 0, %v335
        %v337 = vsel %vm331, %v336, %v335
        %vm338 = vcmp.ne.s32.totalorder %v337, 0
        %vm339 = vcmp.lt.s32.totalorder %v337, 0
        %vm340 = vmand %vm339, %vm338
        %v341 = vadd.s32 %v337, 2
        %v342 = vsel %vm340, %v341, %v337
        %vm343 = vcmp.eq.s32.totalorder %v342, 0
        %344 = vrot.lane.b32.xlu0 %v201, 127
        %v345 = vpop.permute.xlu0 %344
        %346 = vrot.lane.b32.xlu0 %v202, 127
        %v347 = vpop.permute.xlu0 %346
        %348 = vrot.lane.b32.xlu0 %v203, 127
        %v349 = vpop.permute.xlu0 %348
        %350 = vrot.lane.b32.xlu0 %v204, 127
        %v351 = vpop.permute.xlu0 %350
        %352 = vrot.lane.b32.xlu0 %v205, 127
        %v353 = vpop.permute.xlu0 %352
        %354 = vrot.lane.b32.xlu0 %v206, 127
        %v355 = vpop.permute.xlu0 %354
        %356 = vrot.lane.b32.xlu0 %v207, 127
        %v357 = vpop.permute.xlu0 %356
        %358 = vrot.lane.b32.xlu0 %v208, 127
        %v359 = vpop.permute.xlu0 %358
        %360 = vrot.lane.b32.xlu0 %v209, 127
        %v361 = vpop.permute.xlu0 %360
        %362 = vrot.lane.b32.xlu0 %v210, 127
        %v363 = vpop.permute.xlu0 %362
        %364 = vrot.lane.b32.xlu0 %v211, 127
        %v365 = vpop.permute.xlu0 %364
        %366 = vrot.lane.b32.xlu0 %v212, 127
        %v367 = vpop.permute.xlu0 %366
        %368 = vrot.lane.b32.xlu0 %v213, 127
        %v369 = vpop.permute.xlu0 %368
        %370 = vrot.lane.b32.xlu0 %v214, 127
        %v371 = vpop.permute.xlu0 %370
        %372 = vrot.lane.b32.xlu0 %v215, 127
        %v373 = vpop.permute.xlu0 %372
        %374 = vrot.lane.b32.xlu0 %v216, 127
        %v375 = vpop.permute.xlu0 %374
        %376 = vrot.lane.b32.xlu0 %v217, 127
        %v377 = vpop.permute.xlu0 %376
        %378 = vrot.lane.b32.xlu0 %v218, 127
        %v379 = vpop.permute.xlu0 %378
        %380 = vrot.lane.b32.xlu0 %v219, 127
        %v381 = vpop.permute.xlu0 %380
        %382 = vrot.lane.b32.xlu0 %v220, 127
        %v383 = vpop.permute.xlu0 %382
        %384 = vrot.lane.b32.xlu0 %v221, 127
        %v385 = vpop.permute.xlu0 %384
        %386 = vrot.lane.b32.xlu0 %v222, 127
        %v387 = vpop.permute.xlu0 %386
        %388 = vrot.lane.b32.xlu0 %v223, 127
        %v389 = vpop.permute.xlu0 %388
        %390 = vrot.lane.b32.xlu0 %v224, 127
        %v391 = vpop.permute.xlu0 %390
        %392 = vrot.lane.b32.xlu0 %v225, 127
        %v393 = vpop.permute.xlu0 %392
        %394 = vrot.lane.b32.xlu0 %v226, 127
        %v395 = vpop.permute.xlu0 %394
        %396 = vrot.lane.b32.xlu0 %v227, 127
        %v397 = vpop.permute.xlu0 %396
        %398 = vrot.lane.b32.xlu0 %v228, 127
        %v399 = vpop.permute.xlu0 %398
        %400 = vrot.lane.b32.xlu0 %v229, 127
        %v401 = vpop.permute.xlu0 %400
        %402 = vrot.lane.b32.xlu0 %v230, 127
        %v403 = vpop.permute.xlu0 %402
        %404 = vrot.lane.b32.xlu0 %v231, 127
        %v405 = vpop.permute.xlu0 %404
        %406 = vrot.lane.b32.xlu0 %v232, 127
        %v407 = vpop.permute.xlu0 %406
        %408 = vrot.lane.b32.xlu0 %v233, 127
        %v409 = vpop.permute.xlu0 %408
        %410 = vrot.lane.b32.xlu0 %v234, 127
        %v411 = vpop.permute.xlu0 %410
        %412 = vrot.lane.b32.xlu0 %v235, 127
        %v413 = vpop.permute.xlu0 %412
        %414 = vrot.lane.b32.xlu0 %v236, 127
        %v415 = vpop.permute.xlu0 %414
        %416 = vrot.lane.b32.xlu0 %v237, 127
        %v417 = vpop.permute.xlu0 %416
        %418 = vrot.lane.b32.xlu0 %v238, 127
        %v419 = vpop.permute.xlu0 %418
        %420 = vrot.lane.b32.xlu0 %v239, 127
        %v421 = vpop.permute.xlu0 %420
        %422 = vrot.lane.b32.xlu0 %v240, 127
        %v423 = vpop.permute.xlu0 %422
        %424 = vrot.lane.b32.xlu0 %v241, 127
        %v425 = vpop.permute.xlu0 %424
        %426 = vrot.lane.b32.xlu0 %v242, 127
        %v427 = vpop.permute.xlu0 %426
        %428 = vrot.lane.b32.xlu0 %v243, 127
        %v429 = vpop.permute.xlu0 %428
        %430 = vrot.lane.b32.xlu0 %v244, 127
        %v431 = vpop.permute.xlu0 %430
        %432 = vrot.lane.b32.xlu0 %v245, 127
        %v433 = vpop.permute.xlu0 %432
        %434 = vrot.lane.b32.xlu0 %v246, 127
        %v435 = vpop.permute.xlu0 %434
        %436 = vrot.lane.b32.xlu0 %v247, 127
        %v437 = vpop.permute.xlu0 %436
        %438 = vrot.lane.b32.xlu0 %v248, 127
        %v439 = vpop.permute.xlu0 %438
        %440 = vrot.lane.b32.xlu0 %v249, 127
        %v441 = vpop.permute.xlu0 %440
        %442 = vrot.lane.b32.xlu0 %v250, 127
        %v443 = vpop.permute.xlu0 %442
        %444 = vrot.lane.b32.xlu0 %v251, 127
        %v445 = vpop.permute.xlu0 %444
        %446 = vrot.lane.b32.xlu0 %v252, 127
        %v447 = vpop.permute.xlu0 %446
        %448 = vrot.lane.b32.xlu0 %v253, 127
        %v449 = vpop.permute.xlu0 %448
        %450 = vrot.lane.b32.xlu0 %v254, 127
        %v451 = vpop.permute.xlu0 %450
        %452 = vrot.lane.b32.xlu0 %v255, 127
        %v453 = vpop.permute.xlu0 %452
        %454 = vrot.lane.b32.xlu0 %v256, 127
        %v455 = vpop.permute.xlu0 %454
        %456 = vrot.lane.b32.xlu0 %v257, 127
        %v457 = vpop.permute.xlu0 %456
        %458 = vrot.lane.b32.xlu0 %v258, 127
        %v459 = vpop.permute.xlu0 %458
        %460 = vrot.lane.b32.xlu0 %v259, 127
        %v461 = vpop.permute.xlu0 %460
        %462 = vrot.lane.b32.xlu0 %v260, 127
        %v463 = vpop.permute.xlu0 %462
        %464 = vrot.lane.b32.xlu0 %v261, 127
        %v465 = vpop.permute.xlu0 %464
        %466 = vrot.lane.b32.xlu0 %v262, 127
        %v467 = vpop.permute.xlu0 %466
        %468 = vrot.lane.b32.xlu0 %v263, 127
        %v469 = vpop.permute.xlu0 %468
        %470 = vrot.lane.b32.xlu0 %v264, 127
        %v471 = vpop.permute.xlu0 %470
        %472 = vrot.lane.b32.xlu0 %v265, 127
        %v473 = vpop.permute.xlu0 %472
        %474 = vrot.lane.b32.xlu0 %v266, 127
        %v475 = vpop.permute.xlu0 %474
        %476 = vrot.lane.b32.xlu0 %v267, 127
        %v477 = vpop.permute.xlu0 %476
        %478 = vrot.lane.b32.xlu0 %v268, 127
        %v479 = vpop.permute.xlu0 %478
        %480 = vrot.lane.b32.xlu0 %v269, 127
        %v481 = vpop.permute.xlu0 %480
        %482 = vrot.lane.b32.xlu0 %v270, 127
        %v483 = vpop.permute.xlu0 %482
        %484 = vrot.lane.b32.xlu0 %v271, 127
        %v485 = vpop.permute.xlu0 %484
        %486 = vrot.lane.b32.xlu0 %v272, 127
        %v487 = vpop.permute.xlu0 %486
        %488 = vrot.lane.b32.xlu0 %v273, 127
        %v489 = vpop.permute.xlu0 %488
        %490 = vrot.lane.b32.xlu0 %v274, 127
        %v491 = vpop.permute.xlu0 %490
        %492 = vrot.lane.b32.xlu0 %v275, 127
        %v493 = vpop.permute.xlu0 %492
        %494 = vrot.lane.b32.xlu0 %v276, 127
        %v495 = vpop.permute.xlu0 %494
        %496 = vrot.lane.b32.xlu0 %v277, 127
        %v497 = vpop.permute.xlu0 %496
        %498 = vrot.lane.b32.xlu0 %v278, 127
        %v499 = vpop.permute.xlu0 %498
        %500 = vrot.lane.b32.xlu0 %v279, 127
        %v501 = vpop.permute.xlu0 %500
        %502 = vrot.lane.b32.xlu0 %v280, 127
        %v503 = vpop.permute.xlu0 %502
        %504 = vrot.lane.b32.xlu0 %v281, 127
        %v505 = vpop.permute.xlu0 %504
        %506 = vrot.lane.b32.xlu0 %v282, 127
        %v507 = vpop.permute.xlu0 %506
        %508 = vrot.lane.b32.xlu0 %v283, 127
        %v509 = vpop.permute.xlu0 %508
        %510 = vrot.lane.b32.xlu0 %v284, 127
        %v511 = vpop.permute.xlu0 %510
        %512 = vrot.lane.b32.xlu0 %v285, 127
        %v513 = vpop.permute.xlu0 %512
        %514 = vrot.lane.b32.xlu0 %v286, 127
        %v515 = vpop.permute.xlu0 %514
        %516 = vrot.lane.b32.xlu0 %v287, 127
        %v517 = vpop.permute.xlu0 %516
        %518 = vrot.lane.b32.xlu0 %v288, 127
        %v519 = vpop.permute.xlu0 %518
        %520 = vrot.lane.b32.xlu0 %v289, 127
        %v521 = vpop.permute.xlu0 %520
        %522 = vrot.lane.b32.xlu0 %v290, 127
        %v523 = vpop.permute.xlu0 %522
        %524 = vrot.lane.b32.xlu0 %v291, 127
        %v525 = vpop.permute.xlu0 %524
        %526 = vrot.lane.b32.xlu0 %v292, 127
        %v527 = vpop.permute.xlu0 %526
        %528 = vrot.lane.b32.xlu0 %v293, 127
        %v529 = vpop.permute.xlu0 %528
        %530 = vrot.lane.b32.xlu0 %v294, 127
        %v531 = vpop.permute.xlu0 %530
        %532 = vrot.lane.b32.xlu0 %v295, 127
        %v533 = vpop.permute.xlu0 %532
        %534 = vrot.lane.b32.xlu0 %v296, 127
        %v535 = vpop.permute.xlu0 %534
        %536 = vrot.lane.b32.xlu0 %v297, 127
        %v537 = vpop.permute.xlu0 %536
        %538 = vrot.lane.b32.xlu0 %v298, 127
        %v539 = vpop.permute.xlu0 %538
        %540 = vrot.lane.b32.xlu0 %v299, 127
        %v541 = vpop.permute.xlu0 %540
        %542 = vrot.lane.b32.xlu0 %v300, 127
        %v543 = vpop.permute.xlu0 %542
        %544 = vrot.lane.b32.xlu0 %v301, 127
        %v545 = vpop.permute.xlu0 %544
        %546 = vrot.lane.b32.xlu0 %v302, 127
        %v547 = vpop.permute.xlu0 %546
        %548 = vrot.lane.b32.xlu0 %v303, 127
        %v549 = vpop.permute.xlu0 %548
        %550 = vrot.lane.b32.xlu0 %v304, 127
        %v551 = vpop.permute.xlu0 %550
        %552 = vrot.lane.b32.xlu0 %v305, 127
        %v553 = vpop.permute.xlu0 %552
        %554 = vrot.lane.b32.xlu0 %v306, 127
        %v555 = vpop.permute.xlu0 %554
        %556 = vrot.lane.b32.xlu0 %v307, 127
        %v557 = vpop.permute.xlu0 %556
        %558 = vrot.lane.b32.xlu0 %v308, 127
        %v559 = vpop.permute.xlu0 %558
        %560 = vrot.lane.b32.xlu0 %v309, 127
        %v561 = vpop.permute.xlu0 %560
        %562 = vrot.lane.b32.xlu0 %v310, 127
        %v563 = vpop.permute.xlu0 %562
        %564 = vrot.lane.b32.xlu0 %v311, 127
        %v565 = vpop.permute.xlu0 %564
        %566 = vrot.lane.b32.xlu0 %v312, 127
        %v567 = vpop.permute.xlu0 %566
        %568 = vrot.lane.b32.xlu0 %v313, 127
        %v569 = vpop.permute.xlu0 %568
        %570 = vrot.lane.b32.xlu0 %v314, 127
        %v571 = vpop.permute.xlu0 %570
        %572 = vrot.lane.b32.xlu0 %v315, 127
        %v573 = vpop.permute.xlu0 %572
        %574 = vrot.lane.b32.xlu0 %v316, 127
        %v575 = vpop.permute.xlu0 %574
        %576 = vrot.lane.b32.xlu0 %v317, 127
        %v577 = vpop.permute.xlu0 %576
        %578 = vrot.lane.b32.xlu0 %v318, 127
        %v579 = vpop.permute.xlu0 %578
        %580 = vrot.lane.b32.xlu0 %v319, 127
        %v581 = vpop.permute.xlu0 %580
        %582 = vrot.lane.b32.xlu0 %v320, 127
        %v583 = vpop.permute.xlu0 %582
        %584 = vrot.lane.b32.xlu0 %v321, 127
        %v585 = vpop.permute.xlu0 %584
        %586 = vrot.lane.b32.xlu0 %v322, 127
        %v587 = vpop.permute.xlu0 %586
        %588 = vrot.lane.b32.xlu0 %v323, 127
        %v589 = vpop.permute.xlu0 %588
        %590 = vrot.lane.b32.xlu0 %v324, 127
        %v591 = vpop.permute.xlu0 %590
        %592 = vrot.lane.b32.xlu0 %v325, 127
        %v593 = vpop.permute.xlu0 %592
        %594 = vrot.lane.b32.xlu0 %v326, 127
        %v595 = vpop.permute.xlu0 %594
        %596 = vrot.lane.b32.xlu0 %v327, 127
        %v597 = vpop.permute.xlu0 %596
        %598 = vrot.lane.b32.xlu0 %v328, 127
        %v599 = vpop.permute.xlu0 %598
        %600 = vrot.lane.b32.xlu0 %v201, 1
        %v601 = vpop.permute.xlu0 %600
        %602 = vrot.lane.b32.xlu0 %v202, 1
        %v603 = vpop.permute.xlu0 %602
        %604 = vrot.lane.b32.xlu0 %v203, 1
        %v605 = vpop.permute.xlu0 %604
        %606 = vrot.lane.b32.xlu0 %v204, 1
        %v607 = vpop.permute.xlu0 %606
        %608 = vrot.lane.b32.xlu0 %v205, 1
        %v609 = vpop.permute.xlu0 %608
        %610 = vrot.lane.b32.xlu0 %v206, 1
        %v611 = vpop.permute.xlu0 %610
        %612 = vrot.lane.b32.xlu0 %v207, 1
        %v613 = vpop.permute.xlu0 %612
        %614 = vrot.lane.b32.xlu0 %v208, 1
        %v615 = vpop.permute.xlu0 %614
        %616 = vrot.lane.b32.xlu0 %v209, 1
        %v617 = vpop.permute.xlu0 %616
        %618 = vrot.lane.b32.xlu0 %v210, 1
        %v619 = vpop.permute.xlu0 %618
        %620 = vrot.lane.b32.xlu0 %v211, 1
        %v621 = vpop.permute.xlu0 %620
        %622 = vrot.lane.b32.xlu0 %v212, 1
        %v623 = vpop.permute.xlu0 %622
        %624 = vrot.lane.b32.xlu0 %v213, 1
        %v625 = vpop.permute.xlu0 %624
        %626 = vrot.lane.b32.xlu0 %v214, 1
        %v627 = vpop.permute.xlu0 %626
        %628 = vrot.lane.b32.xlu0 %v215, 1
        %v629 = vpop.permute.xlu0 %628
        %630 = vrot.lane.b32.xlu0 %v216, 1
        %v631 = vpop.permute.xlu0 %630
        %632 = vrot.lane.b32.xlu0 %v217, 1
        %v633 = vpop.permute.xlu0 %632
        %634 = vrot.lane.b32.xlu0 %v218, 1
        %v635 = vpop.permute.xlu0 %634
        %636 = vrot.lane.b32.xlu0 %v219, 1
        %v637 = vpop.permute.xlu0 %636
        %638 = vrot.lane.b32.xlu0 %v220, 1
        %v639 = vpop.permute.xlu0 %638
        %640 = vrot.lane.b32.xlu0 %v221, 1
        %v641 = vpop.permute.xlu0 %640
        %642 = vrot.lane.b32.xlu0 %v222, 1
        %v643 = vpop.permute.xlu0 %642
        %644 = vrot.lane.b32.xlu0 %v223, 1
        %v645 = vpop.permute.xlu0 %644
        %646 = vrot.lane.b32.xlu0 %v224, 1
        %v647 = vpop.permute.xlu0 %646
        %648 = vrot.lane.b32.xlu0 %v225, 1
        %v649 = vpop.permute.xlu0 %648
        %650 = vrot.lane.b32.xlu0 %v226, 1
        %v651 = vpop.permute.xlu0 %650
        %652 = vrot.lane.b32.xlu0 %v227, 1
        %v653 = vpop.permute.xlu0 %652
        %654 = vrot.lane.b32.xlu0 %v228, 1
        %v655 = vpop.permute.xlu0 %654
        %656 = vrot.lane.b32.xlu0 %v229, 1
        %v657 = vpop.permute.xlu0 %656
        %658 = vrot.lane.b32.xlu0 %v230, 1
        %v659 = vpop.permute.xlu0 %658
        %660 = vrot.lane.b32.xlu0 %v231, 1
        %v661 = vpop.permute.xlu0 %660
        %662 = vrot.lane.b32.xlu0 %v232, 1
        %v663 = vpop.permute.xlu0 %662
        %664 = vrot.lane.b32.xlu0 %v233, 1
        %v665 = vpop.permute.xlu0 %664
        %666 = vrot.lane.b32.xlu0 %v234, 1
        %v667 = vpop.permute.xlu0 %666
        %668 = vrot.lane.b32.xlu0 %v235, 1
        %v669 = vpop.permute.xlu0 %668
        %670 = vrot.lane.b32.xlu0 %v236, 1
        %v671 = vpop.permute.xlu0 %670
        %672 = vrot.lane.b32.xlu0 %v237, 1
        %v673 = vpop.permute.xlu0 %672
        %674 = vrot.lane.b32.xlu0 %v238, 1
        %v675 = vpop.permute.xlu0 %674
        %676 = vrot.lane.b32.xlu0 %v239, 1
        %v677 = vpop.permute.xlu0 %676
        %678 = vrot.lane.b32.xlu0 %v240, 1
        %v679 = vpop.permute.xlu0 %678
        %680 = vrot.lane.b32.xlu0 %v241, 1
        %v681 = vpop.permute.xlu0 %680
        %682 = vrot.lane.b32.xlu0 %v242, 1
        %v683 = vpop.permute.xlu0 %682
        %684 = vrot.lane.b32.xlu0 %v243, 1
        %v685 = vpop.permute.xlu0 %684
        %686 = vrot.lane.b32.xlu0 %v244, 1
        %v687 = vpop.permute.xlu0 %686
        %688 = vrot.lane.b32.xlu0 %v245, 1
        %v689 = vpop.permute.xlu0 %688
        %690 = vrot.lane.b32.xlu0 %v246, 1
        %v691 = vpop.permute.xlu0 %690
        %692 = vrot.lane.b32.xlu0 %v247, 1
        %v693 = vpop.permute.xlu0 %692
        %694 = vrot.lane.b32.xlu0 %v248, 1
        %v695 = vpop.permute.xlu0 %694
        %696 = vrot.lane.b32.xlu0 %v249, 1
        %v697 = vpop.permute.xlu0 %696
        %698 = vrot.lane.b32.xlu0 %v250, 1
        %v699 = vpop.permute.xlu0 %698
        %700 = vrot.lane.b32.xlu0 %v251, 1
        %v701 = vpop.permute.xlu0 %700
        %702 = vrot.lane.b32.xlu0 %v252, 1
        %v703 = vpop.permute.xlu0 %702
        %704 = vrot.lane.b32.xlu0 %v253, 1
        %v705 = vpop.permute.xlu0 %704
        %706 = vrot.lane.b32.xlu0 %v254, 1
        %v707 = vpop.permute.xlu0 %706
        %708 = vrot.lane.b32.xlu0 %v255, 1
        %v709 = vpop.permute.xlu0 %708
        %710 = vrot.lane.b32.xlu0 %v256, 1
        %v711 = vpop.permute.xlu0 %710
        %712 = vrot.lane.b32.xlu0 %v257, 1
        %v713 = vpop.permute.xlu0 %712
        %714 = vrot.lane.b32.xlu0 %v258, 1
        %v715 = vpop.permute.xlu0 %714
        %716 = vrot.lane.b32.xlu0 %v259, 1
        %v717 = vpop.permute.xlu0 %716
        %718 = vrot.lane.b32.xlu0 %v260, 1
        %v719 = vpop.permute.xlu0 %718
        %720 = vrot.lane.b32.xlu0 %v261, 1
        %v721 = vpop.permute.xlu0 %720
        %722 = vrot.lane.b32.xlu0 %v262, 1
        %v723 = vpop.permute.xlu0 %722
        %724 = vrot.lane.b32.xlu0 %v263, 1
        %v725 = vpop.permute.xlu0 %724
        %726 = vrot.lane.b32.xlu0 %v264, 1
        %v727 = vpop.permute.xlu0 %726
        %728 = vrot.lane.b32.xlu0 %v265, 1
        %v729 = vpop.permute.xlu0 %728
        %730 = vrot.lane.b32.xlu0 %v266, 1
        %v731 = vpop.permute.xlu0 %730
        %732 = vrot.lane.b32.xlu0 %v267, 1
        %v733 = vpop.permute.xlu0 %732
        %734 = vrot.lane.b32.xlu0 %v268, 1
        %v735 = vpop.permute.xlu0 %734
        %736 = vrot.lane.b32.xlu0 %v269, 1
        %v737 = vpop.permute.xlu0 %736
        %738 = vrot.lane.b32.xlu0 %v270, 1
        %v739 = vpop.permute.xlu0 %738
        %740 = vrot.lane.b32.xlu0 %v271, 1
        %v741 = vpop.permute.xlu0 %740
        %742 = vrot.lane.b32.xlu0 %v272, 1
        %v743 = vpop.permute.xlu0 %742
        %744 = vrot.lane.b32.xlu0 %v273, 1
        %v745 = vpop.permute.xlu0 %744
        %746 = vrot.lane.b32.xlu0 %v274, 1
        %v747 = vpop.permute.xlu0 %746
        %748 = vrot.lane.b32.xlu0 %v275, 1
        %v749 = vpop.permute.xlu0 %748
        %750 = vrot.lane.b32.xlu0 %v276, 1
        %v751 = vpop.permute.xlu0 %750
        %752 = vrot.lane.b32.xlu0 %v277, 1
        %v753 = vpop.permute.xlu0 %752
        %754 = vrot.lane.b32.xlu0 %v278, 1
        %v755 = vpop.permute.xlu0 %754
        %756 = vrot.lane.b32.xlu0 %v279, 1
        %v757 = vpop.permute.xlu0 %756
        %758 = vrot.lane.b32.xlu0 %v280, 1
        %v759 = vpop.permute.xlu0 %758
        %760 = vrot.lane.b32.xlu0 %v281, 1
        %v761 = vpop.permute.xlu0 %760
        %762 = vrot.lane.b32.xlu0 %v282, 1
        %v763 = vpop.permute.xlu0 %762
        %764 = vrot.lane.b32.xlu0 %v283, 1
        %v765 = vpop.permute.xlu0 %764
        %766 = vrot.lane.b32.xlu0 %v284, 1
        %v767 = vpop.permute.xlu0 %766
        %768 = vrot.lane.b32.xlu0 %v285, 1
        %v769 = vpop.permute.xlu0 %768
        %770 = vrot.lane.b32.xlu0 %v286, 1
        %v771 = vpop.permute.xlu0 %770
        %772 = vrot.lane.b32.xlu0 %v287, 1
        %v773 = vpop.permute.xlu0 %772
        %774 = vrot.lane.b32.xlu0 %v288, 1
        %v775 = vpop.permute.xlu0 %774
        %776 = vrot.lane.b32.xlu0 %v289, 1
        %v777 = vpop.permute.xlu0 %776
        %778 = vrot.lane.b32.xlu0 %v290, 1
        %v779 = vpop.permute.xlu0 %778
        %780 = vrot.lane.b32.xlu0 %v291, 1
        %v781 = vpop.permute.xlu0 %780
        %782 = vrot.lane.b32.xlu0 %v292, 1
        %v783 = vpop.permute.xlu0 %782
        %784 = vrot.lane.b32.xlu0 %v293, 1
        %v785 = vpop.permute.xlu0 %784
        %786 = vrot.lane.b32.xlu0 %v294, 1
        %v787 = vpop.permute.xlu0 %786
        %788 = vrot.lane.b32.xlu0 %v295, 1
        %v789 = vpop.permute.xlu0 %788
        %790 = vrot.lane.b32.xlu0 %v296, 1
        %v791 = vpop.permute.xlu0 %790
        %792 = vrot.lane.b32.xlu0 %v297, 1
        %v793 = vpop.permute.xlu0 %792
        %794 = vrot.lane.b32.xlu0 %v298, 1
        %v795 = vpop.permute.xlu0 %794
        %796 = vrot.lane.b32.xlu0 %v299, 1
        %v797 = vpop.permute.xlu0 %796
        %798 = vrot.lane.b32.xlu0 %v300, 1
        %v799 = vpop.permute.xlu0 %798
        %800 = vrot.lane.b32.xlu0 %v301, 1
        %v801 = vpop.permute.xlu0 %800
        %802 = vrot.lane.b32.xlu0 %v302, 1
        %v803 = vpop.permute.xlu0 %802
        %804 = vrot.lane.b32.xlu0 %v303, 1
        %v805 = vpop.permute.xlu0 %804
        %806 = vrot.lane.b32.xlu0 %v304, 1
        %v807 = vpop.permute.xlu0 %806
        %808 = vrot.lane.b32.xlu0 %v305, 1
        %v809 = vpop.permute.xlu0 %808
        %810 = vrot.lane.b32.xlu0 %v306, 1
        %v811 = vpop.permute.xlu0 %810
        %812 = vrot.lane.b32.xlu0 %v307, 1
        %v813 = vpop.permute.xlu0 %812
        %814 = vrot.lane.b32.xlu0 %v308, 1
        %v815 = vpop.permute.xlu0 %814
        %816 = vrot.lane.b32.xlu0 %v309, 1
        %v817 = vpop.permute.xlu0 %816
        %818 = vrot.lane.b32.xlu0 %v310, 1
        %v819 = vpop.permute.xlu0 %818
        %820 = vrot.lane.b32.xlu0 %v311, 1
        %v821 = vpop.permute.xlu0 %820
        %822 = vrot.lane.b32.xlu0 %v312, 1
        %v823 = vpop.permute.xlu0 %822
        %824 = vrot.lane.b32.xlu0 %v313, 1
        %v825 = vpop.permute.xlu0 %824
        %826 = vrot.lane.b32.xlu0 %v314, 1
        %v827 = vpop.permute.xlu0 %826
        %828 = vrot.lane.b32.xlu0 %v315, 1
        %v829 = vpop.permute.xlu0 %828
        %830 = vrot.lane.b32.xlu0 %v316, 1
        %v831 = vpop.permute.xlu0 %830
        %832 = vrot.lane.b32.xlu0 %v317, 1
        %v833 = vpop.permute.xlu0 %832
        %834 = vrot.lane.b32.xlu0 %v318, 1
        %v835 = vpop.permute.xlu0 %834
        %836 = vrot.lane.b32.xlu0 %v319, 1
        %v837 = vpop.permute.xlu0 %836
        %838 = vrot.lane.b32.xlu0 %v320, 1
        %v839 = vpop.permute.xlu0 %838
        %840 = vrot.lane.b32.xlu0 %v321, 1
        %v841 = vpop.permute.xlu0 %840
        %842 = vrot.lane.b32.xlu0 %v322, 1
        %v843 = vpop.permute.xlu0 %842
        %844 = vrot.lane.b32.xlu0 %v323, 1
        %v845 = vpop.permute.xlu0 %844
        %846 = vrot.lane.b32.xlu0 %v324, 1
        %v847 = vpop.permute.xlu0 %846
        %848 = vrot.lane.b32.xlu0 %v325, 1
        %v849 = vpop.permute.xlu0 %848
        %850 = vrot.lane.b32.xlu0 %v326, 1
        %v851 = vpop.permute.xlu0 %850
        %852 = vrot.lane.b32.xlu0 %v327, 1
        %v853 = vpop.permute.xlu0 %852
        %854 = vrot.lane.b32.xlu0 %v328, 1
        %v855 = vpop.permute.xlu0 %854
        %v856 = vsel %vm343, 1, 0
        %vm857 = vcmp.eq.s32.totalorder %v856, 1
        %v858 = vsel %vm857, %v345, %v601
        %v859 = vsel %vm857, %v347, %v603
        %v860 = vsel %vm857, %v349, %v605
        %v861 = vsel %vm857, %v351, %v607
        %v862 = vsel %vm857, %v353, %v609
        %v863 = vsel %vm857, %v355, %v611
        %v864 = vsel %vm857, %v357, %v613
        %v865 = vsel %vm857, %v359, %v615
        %v866 = vsel %vm857, %v361, %v617
        %v867 = vsel %vm857, %v363, %v619
        %v868 = vsel %vm857, %v365, %v621
        %v869 = vsel %vm857, %v367, %v623
        %v870 = vsel %vm857, %v369, %v625
        %v871 = vsel %vm857, %v371, %v627
        %v872 = vsel %vm857, %v373, %v629
        %v873 = vsel %vm857, %v375, %v631
        %v874 = vsel %vm857, %v377, %v633
        %v875 = vsel %vm857, %v379, %v635
        %v876 = vsel %vm857, %v381, %v637
        %v877 = vsel %vm857, %v383, %v639
        %v878 = vsel %vm857, %v385, %v641
        %v879 = vsel %vm857, %v387, %v643
        %v880 = vsel %vm857, %v389, %v645
        %v881 = vsel %vm857, %v391, %v647
        %v882 = vsel %vm857, %v393, %v649
        %v883 = vsel %vm857, %v395, %v651
        %v884 = vsel %vm857, %v397, %v653
        %v885 = vsel %vm857, %v399, %v655
        %v886 = vsel %vm857, %v401, %v657
        %v887 = vsel %vm857, %v403, %v659
        %v888 = vsel %vm857, %v405, %v661
        %v889 = vsel %vm857, %v407, %v663
        %v890 = vsel %vm857, %v409, %v665
        %v891 = vsel %vm857, %v411, %v667
        %v892 = vsel %vm857, %v413, %v669
        %v893 = vsel %vm857, %v415, %v671
        %v894 = vsel %vm857, %v417, %v673
        %v895 = vsel %vm857, %v419, %v675
        %v896 = vsel %vm857, %v421, %v677
        %v897 = vsel %vm857, %v423, %v679
        %v898 = vsel %vm857, %v425, %v681
        %v899 = vsel %vm857, %v427, %v683
        %v900 = vsel %vm857, %v429, %v685
        %v901 = vsel %vm857, %v431, %v687
        %v902 = vsel %vm857, %v433, %v689
        %v903 = vsel %vm857, %v435, %v691
        %v904 = vsel %vm857, %v437, %v693
        %v905 = vsel %vm857, %v439, %v695
        %v906 = vsel %vm857, %v441, %v697
        %v907 = vsel %vm857, %v443, %v699
        %v908 = vsel %vm857, %v445, %v701
        %v909 = vsel %vm857, %v447, %v703
        %v910 = vsel %vm857, %v449, %v705
        %v911 = vsel %vm857, %v451, %v707
        %v912 = vsel %vm857, %v453, %v709
        %v913 = vsel %vm857, %v455, %v711
        %v914 = vsel %vm857, %v457, %v713
        %v915 = vsel %vm857, %v459, %v715
        %v916 = vsel %vm857, %v461, %v717
        %v917 = vsel %vm857, %v463, %v719
        %v918 = vsel %vm857, %v465, %v721
        %v919 = vsel %vm857, %v467, %v723
        %v920 = vsel %vm857, %v469, %v725
        %v921 = vsel %vm857, %v471, %v727
        %v922 = vsel %vm857, %v473, %v729
        %v923 = vsel %vm857, %v475, %v731
        %v924 = vsel %vm857, %v477, %v733
        %v925 = vsel %vm857, %v479, %v735
        %v926 = vsel %vm857, %v481, %v737
        %v927 = vsel %vm857, %v483, %v739
        %v928 = vsel %vm857, %v485, %v741
        %v929 = vsel %vm857, %v487, %v743
        %v930 = vsel %vm857, %v489, %v745
        %v931 = vsel %vm857, %v491, %v747
        %v932 = vsel %vm857, %v493, %v749
        %v933 = vsel %vm857, %v495, %v751
        %v934 = vsel %vm857, %v497, %v753
        %v935 = vsel %vm857, %v499, %v755
        %v936 = vsel %vm857, %v501, %v757
        %v937 = vsel %vm857, %v503, %v759
        %v938 = vsel %vm857, %v505, %v761
        %v939 = vsel %vm857, %v507, %v763
        %v940 = vsel %vm857, %v509, %v765
        %v941 = vsel %vm857, %v511, %v767
        %v942 = vsel %vm857, %v513, %v769
        %v943 = vsel %vm857, %v515, %v771
        %v944 = vsel %vm857, %v517, %v773
        %v945 = vsel %vm857, %v519, %v775
        %v946 = vsel %vm857, %v521, %v777
        %v947 = vsel %vm857, %v523, %v779
        %v948 = vsel %vm857, %v525, %v781
        %v949 = vsel %vm857, %v527, %v783
        %v950 = vsel %vm857, %v529, %v785
        %v951 = vsel %vm857, %v531, %v787
        %v952 = vsel %vm857, %v533, %v789
        %v953 = vsel %vm857, %v535, %v791
        %v954 = vsel %vm857, %v537, %v793
        %v955 = vsel %vm857, %v539, %v795
        %v956 = vsel %vm857, %v541, %v797
        %v957 = vsel %vm857, %v543, %v799
        %v958 = vsel %vm857, %v545, %v801
        %v959 = vsel %vm857, %v547, %v803
        %v960 = vsel %vm857, %v549, %v805
        %v961 = vsel %vm857, %v551, %v807
        %v962 = vsel %vm857, %v553, %v809
        %v963 = vsel %vm857, %v555, %v811
        %v964 = vsel %vm857, %v557, %v813
        %v965 = vsel %vm857, %v559, %v815
        %v966 = vsel %vm857, %v561, %v817
        %v967 = vsel %vm857, %v563, %v819
        %v968 = vsel %vm857, %v565, %v821
        %v969 = vsel %vm857, %v567, %v823
        %v970 = vsel %vm857, %v569, %v825
        %v971 = vsel %vm857, %v571, %v827
        %v972 = vsel %vm857, %v573, %v829
        %v973 = vsel %vm857, %v575, %v831
        %v974 = vsel %vm857, %v577, %v833
        %v975 = vsel %vm857, %v579, %v835
        %v976 = vsel %vm857, %v581, %v837
        %v977 = vsel %vm857, %v583, %v839
        %v978 = vsel %vm857, %v585, %v841
        %v979 = vsel %vm857, %v587, %v843
        %v980 = vsel %vm857, %v589, %v845
        %v981 = vsel %vm857, %v591, %v847
        %v982 = vsel %vm857, %v593, %v849
        %v983 = vsel %vm857, %v595, %v851
        %v984 = vsel %vm857, %v597, %v853
        %v985 = vsel %vm857, %v599, %v855
        %s986 = sld [smem:[#allocation2]]
        %s987 = sld [smem:[#allocation2 + $0x3]]
        %v988 = vstv %s986
        %v989 = vstv %s987
        %v990 = vsel %vm343, %v988, %v989
        %s991 = sld [smem:[#allocation2 + $0x1]]
        %s992 = sld [smem:[#allocation2 + $0x2]]
        %v993 = vstv %s991
        %v994 = vstv %s992
        %v995 = vsel %vm343, %v993, %v994
        %s996 = sld [smem:[#allocation4]]
        %s997 = sld [smem:[#allocation4 + $0x1]]
        %v998 = vstv %s996
        %v999 = vstv %s997
        %v1000 = vsel %vm343, %v998, %v999
        %v1001 = vmul.f32 %v990, %v201
        %v1002 = vmul.f32 %v990, %v202
        %v1003 = vmul.f32 %v990, %v203
        %v1004 = vmul.f32 %v990, %v204
        %v1005 = vmul.f32 %v990, %v205
        %v1006 = vmul.f32 %v990, %v206
        %v1007 = vmul.f32 %v990, %v207
        %v1008 = vmul.f32 %v990, %v208
        %v1009 = vmul.f32 %v990, %v209
        %v1010 = vmul.f32 %v990, %v210
        %v1011 = vmul.f32 %v990, %v211
        %v1012 = vmul.f32 %v990, %v212
        %v1013 = vmul.f32 %v990, %v213
        %v1014 = vmul.f32 %v990, %v214
        %v1015 = vmul.f32 %v990, %v215
        %v1016 = vmul.f32 %v990, %v216
        %v1017 = vmul.f32 %v990, %v217
        %v1018 = vmul.f32 %v990, %v218
        %v1019 = vmul.f32 %v990, %v219
        %v1020 = vmul.f32 %v990, %v220
        %v1021 = vmul.f32 %v990, %v221
        %v1022 = vmul.f32 %v990, %v222
        %v1023 = vmul.f32 %v990, %v223
        %v1024 = vmul.f32 %v990, %v224
        %v1025 = vmul.f32 %v990, %v225
        %v1026 = vmul.f32 %v990, %v226
        %v1027 = vmul.f32 %v990, %v227
        %v1028 = vmul.f32 %v990, %v228
        %v1029 = vmul.f32 %v990, %v229
        %v1030 = vmul.f32 %v990, %v230
        %v1031 = vmul.f32 %v990, %v231
        %v1032 = vmul.f32 %v990, %v232
        %v1033 = vmul.f32 %v990, %v233
        %v1034 = vmul.f32 %v990, %v234
        %v1035 = vmul.f32 %v990, %v235
        %v1036 = vmul.f32 %v990, %v236
        %v1037 = vmul.f32 %v990, %v237
        %v1038 = vmul.f32 %v990, %v238
        %v1039 = vmul.f32 %v990, %v239
        %v1040 = vmul.f32 %v990, %v240
        %v1041 = vmul.f32 %v990, %v241
        %v1042 = vmul.f32 %v990, %v242
        %v1043 = vmul.f32 %v990, %v243
        %v1044 = vmul.f32 %v990, %v244
        %v1045 = vmul.f32 %v990, %v245
        %v1046 = vmul.f32 %v990, %v246
        %v1047 = vmul.f32 %v990, %v247
        %v1048 = vmul.f32 %v990, %v248
        %v1049 = vmul.f32 %v990, %v249
        %v1050 = vmul.f32 %v990, %v250
        %v1051 = vmul.f32 %v990, %v251
        %v1052 = vmul.f32 %v990, %v252
        %v1053 = vmul.f32 %v990, %v253
        %v1054 = vmul.f32 %v990, %v254
        %v1055 = vmul.f32 %v990, %v255
        %v1056 = vmul.f32 %v990, %v256
        %v1057 = vmul.f32 %v990, %v257
        %v1058 = vmul.f32 %v990, %v258
        %v1059 = vmul.f32 %v990, %v259
        %v1060 = vmul.f32 %v990, %v260
        %v1061 = vmul.f32 %v990, %v261
        %v1062 = vmul.f32 %v990, %v262
        %v1063 = vmul.f32 %v990, %v263
        %v1064 = vmul.f32 %v990, %v264
        %v1065 = vmul.f32 %v990, %v265
        %v1066 = vmul.f32 %v990, %v266
        %v1067 = vmul.f32 %v990, %v267
        %v1068 = vmul.f32 %v990, %v268
        %v1069 = vmul.f32 %v990, %v269
        %v1070 = vmul.f32 %v990, %v270
        %v1071 = vmul.f32 %v990, %v271
        %v1072 = vmul.f32 %v990, %v272
        %v1073 = vmul.f32 %v990, %v273
        %v1074 = vmul.f32 %v990, %v274
        %v1075 = vmul.f32 %v990, %v275
        %v1076 = vmul.f32 %v990, %v276
        %v1077 = vmul.f32 %v990, %v277
        %v1078 = vmul.f32 %v990, %v278
        %v1079 = vmul.f32 %v990, %v279
        %v1080 = vmul.f32 %v990, %v280
        %v1081 = vmul.f32 %v990, %v281
        %v1082 = vmul.f32 %v990, %v282
        %v1083 = vmul.f32 %v990, %v283
        %v1084 = vmul.f32 %v990, %v284
        %v1085 = vmul.f32 %v990, %v285
        %v1086 = vmul.f32 %v990, %v286
        %v1087 = vmul.f32 %v990, %v287
        %v1088 = vmul.f32 %v990, %v288
        %v1089 = vmul.f32 %v990, %v289
        %v1090 = vmul.f32 %v990, %v290
        %v1091 = vmul.f32 %v990, %v291
        %v1092 = vmul.f32 %v990, %v292
        %v1093 = vmul.f32 %v990, %v293
        %v1094 = vmul.f32 %v990, %v294
        %v1095 = vmul.f32 %v990, %v295
        %v1096 = vmul.f32 %v990, %v296
        %v1097 = vmul.f32 %v990, %v297
        %v1098 = vmul.f32 %v990, %v298
        %v1099 = vmul.f32 %v990, %v299
        %v1100 = vmul.f32 %v990, %v300
        %v1101 = vmul.f32 %v990, %v301
        %v1102 = vmul.f32 %v990, %v302
        %v1103 = vmul.f32 %v990, %v303
        %v1104 = vmul.f32 %v990, %v304
        %v1105 = vmul.f32 %v990, %v305
        %v1106 = vmul.f32 %v990, %v306
        %v1107 = vmul.f32 %v990, %v307
        %v1108 = vmul.f32 %v990, %v308
        %v1109 = vmul.f32 %v990, %v309
        %v1110 = vmul.f32 %v990, %v310
        %v1111 = vmul.f32 %v990, %v311
        %v1112 = vmul.f32 %v990, %v312
        %v1113 = vmul.f32 %v990, %v313
        %v1114 = vmul.f32 %v990, %v314
        %v1115 = vmul.f32 %v990, %v315
        %v1116 = vmul.f32 %v990, %v316
        %v1117 = vmul.f32 %v990, %v317
        %v1118 = vmul.f32 %v990, %v318
        %v1119 = vmul.f32 %v990, %v319
        %v1120 = vmul.f32 %v990, %v320
        %v1121 = vmul.f32 %v990, %v321
        %v1122 = vmul.f32 %v990, %v322
        %v1123 = vmul.f32 %v990, %v323
        %v1124 = vmul.f32 %v990, %v324
        %v1125 = vmul.f32 %v990, %v325
        %v1126 = vmul.f32 %v990, %v326
        %v1127 = vmul.f32 %v990, %v327
        %v1128 = vmul.f32 %v990, %v328
        %v1129 = vmul.f32 %v995, %v858
        %v1130 = vmul.f32 %v995, %v859
        %v1131 = vmul.f32 %v995, %v860
        %v1132 = vmul.f32 %v995, %v861
        %v1133 = vmul.f32 %v995, %v862
        %v1134 = vmul.f32 %v995, %v863
        %v1135 = vmul.f32 %v995, %v864
        %v1136 = vmul.f32 %v995, %v865
        %v1137 = vmul.f32 %v995, %v866
        %v1138 = vmul.f32 %v995, %v867
        %v1139 = vmul.f32 %v995, %v868
        %v1140 = vmul.f32 %v995, %v869
        %v1141 = vmul.f32 %v995, %v870
        %v1142 = vmul.f32 %v995, %v871
        %v1143 = vmul.f32 %v995, %v872
        %v1144 = vmul.f32 %v995, %v873
        %v1145 = vmul.f32 %v995, %v874
        %v1146 = vmul.f32 %v995, %v875
        %v1147 = vmul.f32 %v995, %v876
        %v1148 = vmul.f32 %v995, %v877
        %v1149 = vmul.f32 %v995, %v878
        %v1150 = vmul.f32 %v995, %v879
        %v1151 = vmul.f32 %v995, %v880
        %v1152 = vmul.f32 %v995, %v881
        %v1153 = vmul.f32 %v995, %v882
        %v1154 = vmul.f32 %v995, %v883
        %v1155 = vmul.f32 %v995, %v884
        %v1156 = vmul.f32 %v995, %v885
        %v1157 = vmul.f32 %v995, %v886
        %v1158 = vmul.f32 %v995, %v887
        %v1159 = vmul.f32 %v995, %v888
        %v1160 = vmul.f32 %v995, %v889
        %v1161 = vmul.f32 %v995, %v890
        %v1162 = vmul.f32 %v995, %v891
        %v1163 = vmul.f32 %v995, %v892
        %v1164 = vmul.f32 %v995, %v893
        %v1165 = vmul.f32 %v995, %v894
        %v1166 = vmul.f32 %v995, %v895
        %v1167 = vmul.f32 %v995, %v896
        %v1168 = vmul.f32 %v995, %v897
        %v1169 = vmul.f32 %v995, %v898
        %v1170 = vmul.f32 %v995, %v899
        %v1171 = vmul.f32 %v995, %v900
        %v1172 = vmul.f32 %v995, %v901
        %v1173 = vmul.f32 %v995, %v902
        %v1174 = vmul.f32 %v995, %v903
        %v1175 = vmul.f32 %v995, %v904
        %v1176 = vmul.f32 %v995, %v905
        %v1177 = vmul.f32 %v995, %v906
        %v1178 = vmul.f32 %v995, %v907
        %v1179 = vmul.f32 %v995, %v908
        %v1180 = vmul.f32 %v995, %v909
        %v1181 = vmul.f32 %v995, %v910
        %v1182 = vmul.f32 %v995, %v911
        %v1183 = vmul.f32 %v995, %v912
        %v1184 = vmul.f32 %v995, %v913
        %v1185 = vmul.f32 %v995, %v914
        %v1186 = vmul.f32 %v995, %v915
        %v1187 = vmul.f32 %v995, %v916
        %v1188 = vmul.f32 %v995, %v917
        %v1189 = vmul.f32 %v995, %v918
        %v1190 = vmul.f32 %v995, %v919
        %v1191 = vmul.f32 %v995, %v920
        %v1192 = vmul.f32 %v995, %v921
        %v1193 = vmul.f32 %v995, %v922
        %v1194 = vmul.f32 %v995, %v923
        %v1195 = vmul.f32 %v995, %v924
        %v1196 = vmul.f32 %v995, %v925
        %v1197 = vmul.f32 %v995, %v926
        %v1198 = vmul.f32 %v995, %v927
        %v1199 = vmul.f32 %v995, %v928
        %v1200 = vmul.f32 %v995, %v929
        %v1201 = vmul.f32 %v995, %v930
        %v1202 = vmul.f32 %v995, %v931
        %v1203 = vmul.f32 %v995, %v932
        %v1204 = vmul.f32 %v995, %v933
        %v1205 = vmul.f32 %v995, %v934
        %v1206 = vmul.f32 %v995, %v935
        %v1207 = vmul.f32 %v995, %v936
        %v1208 = vmul.f32 %v995, %v937
        %v1209 = vmul.f32 %v995, %v938
        %v1210 = vmul.f32 %v995, %v939
        %v1211 = vmul.f32 %v995, %v940
        %v1212 = vmul.f32 %v995, %v941
        %v1213 = vmul.f32 %v995, %v942
        %v1214 = vmul.f32 %v995, %v943
        %v1215 = vmul.f32 %v995, %v944
        %v1216 = vmul.f32 %v995, %v945
        %v1217 = vmul.f32 %v995, %v946
        %v1218 = vmul.f32 %v995, %v947
        %v1219 = vmul.f32 %v995, %v948
        %v1220 = vmul.f32 %v995, %v949
        %v1221 = vmul.f32 %v995, %v950
        %v1222 = vmul.f32 %v995, %v951
        %v1223 = vmul.f32 %v995, %v952
        %v1224 = vmul.f32 %v995, %v953
        %v1225 = vmul.f32 %v995, %v954
        %v1226 = vmul.f32 %v995, %v955
        %v1227 = vmul.f32 %v995, %v956
        %v1228 = vmul.f32 %v995, %v957
        %v1229 = vmul.f32 %v995, %v958
        %v1230 = vmul.f32 %v995, %v959
        %v1231 = vmul.f32 %v995, %v960
        %v1232 = vmul.f32 %v995, %v961
        %v1233 = vmul.f32 %v995, %v962
        %v1234 = vmul.f32 %v995, %v963
        %v1235 = vmul.f32 %v995, %v964
        %v1236 = vmul.f32 %v995, %v965
        %v1237 = vmul.f32 %v995, %v966
        %v1238 = vmul.f32 %v995, %v967
        %v1239 = vmul.f32 %v995, %v968
        %v1240 = vmul.f32 %v995, %v969
        %v1241 = vmul.f32 %v995, %v970
        %v1242 = vmul.f32 %v995, %v971
        %v1243 = vmul.f32 %v995, %v972
        %v1244 = vmul.f32 %v995, %v973
        %v1245 = vmul.f32 %v995, %v974
        %v1246 = vmul.f32 %v995, %v975
        %v1247 = vmul.f32 %v995, %v976
        %v1248 = vmul.f32 %v995, %v977
        %v1249 = vmul.f32 %v995, %v978
        %v1250 = vmul.f32 %v995, %v979
        %v1251 = vmul.f32 %v995, %v980
        %v1252 = vmul.f32 %v995, %v981
        %v1253 = vmul.f32 %v995, %v982
        %v1254 = vmul.f32 %v995, %v983
        %v1255 = vmul.f32 %v995, %v984
        %v1256 = vmul.f32 %v995, %v985
        %v1257 = vadd.f32 %v1001, %v1129
        %v1258 = vadd.f32 %v1002, %v1130
        %v1259 = vadd.f32 %v1003, %v1131
        %v1260 = vadd.f32 %v1004, %v1132
        %v1261 = vadd.f32 %v1005, %v1133
        %v1262 = vadd.f32 %v1006, %v1134
        %v1263 = vadd.f32 %v1007, %v1135
        %v1264 = vadd.f32 %v1008, %v1136
        %v1265 = vadd.f32 %v1009, %v1137
        %v1266 = vadd.f32 %v1010, %v1138
        %v1267 = vadd.f32 %v1011, %v1139
        %v1268 = vadd.f32 %v1012, %v1140
        %v1269 = vadd.f32 %v1013, %v1141
        %v1270 = vadd.f32 %v1014, %v1142
        %v1271 = vadd.f32 %v1015, %v1143
        %v1272 = vadd.f32 %v1016, %v1144
        %v1273 = vadd.f32 %v1017, %v1145
        %v1274 = vadd.f32 %v1018, %v1146
        %v1275 = vadd.f32 %v1019, %v1147
        %v1276 = vadd.f32 %v1020, %v1148
        %v1277 = vadd.f32 %v1021, %v1149
        %v1278 = vadd.f32 %v1022, %v1150
        %v1279 = vadd.f32 %v1023, %v1151
        %v1280 = vadd.f32 %v1024, %v1152
        %v1281 = vadd.f32 %v1025, %v1153
        %v1282 = vadd.f32 %v1026, %v1154
        %v1283 = vadd.f32 %v1027, %v1155
        %v1284 = vadd.f32 %v1028, %v1156
        %v1285 = vadd.f32 %v1029, %v1157
        %v1286 = vadd.f32 %v1030, %v1158
        %v1287 = vadd.f32 %v1031, %v1159
        %v1288 = vadd.f32 %v1032, %v1160
        %v1289 = vadd.f32 %v1033, %v1161
        %v1290 = vadd.f32 %v1034, %v1162
        %v1291 = vadd.f32 %v1035, %v1163
        %v1292 = vadd.f32 %v1036, %v1164
        %v1293 = vadd.f32 %v1037, %v1165
        %v1294 = vadd.f32 %v1038, %v1166
        %v1295 = vadd.f32 %v1039, %v1167
        %v1296 = vadd.f32 %v1040, %v1168
        %v1297 = vadd.f32 %v1041, %v1169
        %v1298 = vadd.f32 %v1042, %v1170
        %v1299 = vadd.f32 %v1043, %v1171
        %v1300 = vadd.f32 %v1044, %v1172
        %v1301 = vadd.f32 %v1045, %v1173
        %v1302 = vadd.f32 %v1046, %v1174
        %v1303 = vadd.f32 %v1047, %v1175
        %v1304 = vadd.f32 %v1048, %v1176
        %v1305 = vadd.f32 %v1049, %v1177
        %v1306 = vadd.f32 %v1050, %v1178
        %v1307 = vadd.f32 %v1051, %v1179
        %v1308 = vadd.f32 %v1052, %v1180
        %v1309 = vadd.f32 %v1053, %v1181
        %v1310 = vadd.f32 %v1054, %v1182
        %v1311 = vadd.f32 %v1055, %v1183
        %v1312 = vadd.f32 %v1056, %v1184
        %v1313 = vadd.f32 %v1057, %v1185
        %v1314 = vadd.f32 %v1058, %v1186
        %v1315 = vadd.f32 %v1059, %v1187
        %v1316 = vadd.f32 %v1060, %v1188
        %v1317 = vadd.f32 %v1061, %v1189
        %v1318 = vadd.f32 %v1062, %v1190
        %v1319 = vadd.f32 %v1063, %v1191
        %v1320 = vadd.f32 %v1064, %v1192
        %v1321 = vadd.f32 %v1065, %v1193
        %v1322 = vadd.f32 %v1066, %v1194
        %v1323 = vadd.f32 %v1067, %v1195
        %v1324 = vadd.f32 %v1068, %v1196
        %v1325 = vadd.f32 %v1069, %v1197
        %v1326 = vadd.f32 %v1070, %v1198
        %v1327 = vadd.f32 %v1071, %v1199
        %v1328 = vadd.f32 %v1072, %v1200
        %v1329 = vadd.f32 %v1073, %v1201
        %v1330 = vadd.f32 %v1074, %v1202
        %v1331 = vadd.f32 %v1075, %v1203
        %v1332 = vadd.f32 %v1076, %v1204
        %v1333 = vadd.f32 %v1077, %v1205
        %v1334 = vadd.f32 %v1078, %v1206
        %v1335 = vadd.f32 %v1079, %v1207
        %v1336 = vadd.f32 %v1080, %v1208
        %v1337 = vadd.f32 %v1081, %v1209
        %v1338 = vadd.f32 %v1082, %v1210
        %v1339 = vadd.f32 %v1083, %v1211
        %v1340 = vadd.f32 %v1084, %v1212
        %v1341 = vadd.f32 %v1085, %v1213
        %v1342 = vadd.f32 %v1086, %v1214
        %v1343 = vadd.f32 %v1087, %v1215
        %v1344 = vadd.f32 %v1088, %v1216
        %v1345 = vadd.f32 %v1089, %v1217
        %v1346 = vadd.f32 %v1090, %v1218
        %v1347 = vadd.f32 %v1091, %v1219
        %v1348 = vadd.f32 %v1092, %v1220
        %v1349 = vadd.f32 %v1093, %v1221
        %v1350 = vadd.f32 %v1094, %v1222
        %v1351 = vadd.f32 %v1095, %v1223
        %v1352 = vadd.f32 %v1096, %v1224
        %v1353 = vadd.f32 %v1097, %v1225
        %v1354 = vadd.f32 %v1098, %v1226
        %v1355 = vadd.f32 %v1099, %v1227
        %v1356 = vadd.f32 %v1100, %v1228
        %v1357 = vadd.f32 %v1101, %v1229
        %v1358 = vadd.f32 %v1102, %v1230
        %v1359 = vadd.f32 %v1103, %v1231
        %v1360 = vadd.f32 %v1104, %v1232
        %v1361 = vadd.f32 %v1105, %v1233
        %v1362 = vadd.f32 %v1106, %v1234
        %v1363 = vadd.f32 %v1107, %v1235
        %v1364 = vadd.f32 %v1108, %v1236
        %v1365 = vadd.f32 %v1109, %v1237
        %v1366 = vadd.f32 %v1110, %v1238
        %v1367 = vadd.f32 %v1111, %v1239
        %v1368 = vadd.f32 %v1112, %v1240
        %v1369 = vadd.f32 %v1113, %v1241
        %v1370 = vadd.f32 %v1114, %v1242
        %v1371 = vadd.f32 %v1115, %v1243
        %v1372 = vadd.f32 %v1116, %v1244
        %v1373 = vadd.f32 %v1117, %v1245
        %v1374 = vadd.f32 %v1118, %v1246
        %v1375 = vadd.f32 %v1119, %v1247
        %v1376 = vadd.f32 %v1120, %v1248
        %v1377 = vadd.f32 %v1121, %v1249
        %v1378 = vadd.f32 %v1122, %v1250
        %v1379 = vadd.f32 %v1123, %v1251
        %v1380 = vadd.f32 %v1124, %v1252
        %v1381 = vadd.f32 %v1125, %v1253
        %v1382 = vadd.f32 %v1126, %v1254
        %v1383 = vadd.f32 %v1127, %v1255
        %v1384 = vadd.f32 %v1128, %v1256
        %v1385 = vadd.f32 %v1257, %v1000
        %v1386 = vadd.f32 %v1258, %v1000
        %v1387 = vadd.f32 %v1259, %v1000
        %v1388 = vadd.f32 %v1260, %v1000
        %v1389 = vadd.f32 %v1261, %v1000
        %v1390 = vadd.f32 %v1262, %v1000
        %v1391 = vadd.f32 %v1263, %v1000
        %v1392 = vadd.f32 %v1264, %v1000
        %v1393 = vadd.f32 %v1265, %v1000
        %v1394 = vadd.f32 %v1266, %v1000
        %v1395 = vadd.f32 %v1267, %v1000
        %v1396 = vadd.f32 %v1268, %v1000
        %v1397 = vadd.f32 %v1269, %v1000
        %v1398 = vadd.f32 %v1270, %v1000
        %v1399 = vadd.f32 %v1271, %v1000
        %v1400 = vadd.f32 %v1272, %v1000
        %v1401 = vadd.f32 %v1273, %v1000
        %v1402 = vadd.f32 %v1274, %v1000
        %v1403 = vadd.f32 %v1275, %v1000
        %v1404 = vadd.f32 %v1276, %v1000
        %v1405 = vadd.f32 %v1277, %v1000
        %v1406 = vadd.f32 %v1278, %v1000
        %v1407 = vadd.f32 %v1279, %v1000
        %v1408 = vadd.f32 %v1280, %v1000
        %v1409 = vadd.f32 %v1281, %v1000
        %v1410 = vadd.f32 %v1282, %v1000
        %v1411 = vadd.f32 %v1283, %v1000
        %v1412 = vadd.f32 %v1284, %v1000
        %v1413 = vadd.f32 %v1285, %v1000
        %v1414 = vadd.f32 %v1286, %v1000
        %v1415 = vadd.f32 %v1287, %v1000
        %v1416 = vadd.f32 %v1288, %v1000
        %v1417 = vadd.f32 %v1289, %v1000
        %v1418 = vadd.f32 %v1290, %v1000
        %v1419 = vadd.f32 %v1291, %v1000
        %v1420 = vadd.f32 %v1292, %v1000
        %v1421 = vadd.f32 %v1293, %v1000
        %v1422 = vadd.f32 %v1294, %v1000
        %v1423 = vadd.f32 %v1295, %v1000
        %v1424 = vadd.f32 %v1296, %v1000
        %v1425 = vadd.f32 %v1297, %v1000
        %v1426 = vadd.f32 %v1298, %v1000
        %v1427 = vadd.f32 %v1299, %v1000
        %v1428 = vadd.f32 %v1300, %v1000
        %v1429 = vadd.f32 %v1301, %v1000
        %v1430 = vadd.f32 %v1302, %v1000
        %v1431 = vadd.f32 %v1303, %v1000
        %v1432 = vadd.f32 %v1304, %v1000
        %v1433 = vadd.f32 %v1305, %v1000
        %v1434 = vadd.f32 %v1306, %v1000
        %v1435 = vadd.f32 %v1307, %v1000
        %v1436 = vadd.f32 %v1308, %v1000
        %v1437 = vadd.f32 %v1309, %v1000
        %v1438 = vadd.f32 %v1310, %v1000
        %v1439 = vadd.f32 %v1311, %v1000
        %v1440 = vadd.f32 %v1312, %v1000
        %v1441 = vadd.f32 %v1313, %v1000
        %v1442 = vadd.f32 %v1314, %v1000
        %v1443 = vadd.f32 %v1315, %v1000
        %v1444 = vadd.f32 %v1316, %v1000
        %v1445 = vadd.f32 %v1317, %v1000
        %v1446 = vadd.f32 %v1318, %v1000
        %v1447 = vadd.f32 %v1319, %v1000
        %v1448 = vadd.f32 %v1320, %v1000
        %v1449 = vadd.f32 %v1321, %v1000
        %v1450 = vadd.f32 %v1322, %v1000
        %v1451 = vadd.f32 %v1323, %v1000
        %v1452 = vadd.f32 %v1324, %v1000
        %v1453 = vadd.f32 %v1325, %v1000
        %v1454 = vadd.f32 %v1326, %v1000
        %v1455 = vadd.f32 %v1327, %v1000
        %v1456 = vadd.f32 %v1328, %v1000
        %v1457 = vadd.f32 %v1329, %v1000
        %v1458 = vadd.f32 %v1330, %v1000
        %v1459 = vadd.f32 %v1331, %v1000
        %v1460 = vadd.f32 %v1332, %v1000
        %v1461 = vadd.f32 %v1333, %v1000
        %v1462 = vadd.f32 %v1334, %v1000
        %v1463 = vadd.f32 %v1335, %v1000
        %v1464 = vadd.f32 %v1336, %v1000
        %v1465 = vadd.f32 %v1337, %v1000
        %v1466 = vadd.f32 %v1338, %v1000
        %v1467 = vadd.f32 %v1339, %v1000
        %v1468 = vadd.f32 %v1340, %v1000
        %v1469 = vadd.f32 %v1341, %v1000
        %v1470 = vadd.f32 %v1342, %v1000
        %v1471 = vadd.f32 %v1343, %v1000
        %v1472 = vadd.f32 %v1344, %v1000
        %v1473 = vadd.f32 %v1345, %v1000
        %v1474 = vadd.f32 %v1346, %v1000
        %v1475 = vadd.f32 %v1347, %v1000
        %v1476 = vadd.f32 %v1348, %v1000
        %v1477 = vadd.f32 %v1349, %v1000
        %v1478 = vadd.f32 %v1350, %v1000
        %v1479 = vadd.f32 %v1351, %v1000
        %v1480 = vadd.f32 %v1352, %v1000
        %v1481 = vadd.f32 %v1353, %v1000
        %v1482 = vadd.f32 %v1354, %v1000
        %v1483 = vadd.f32 %v1355, %v1000
        %v1484 = vadd.f32 %v1356, %v1000
        %v1485 = vadd.f32 %v1357, %v1000
        %v1486 = vadd.f32 %v1358, %v1000
        %v1487 = vadd.f32 %v1359, %v1000
        %v1488 = vadd.f32 %v1360, %v1000
        %v1489 = vadd.f32 %v1361, %v1000
        %v1490 = vadd.f32 %v1362, %v1000
        %v1491 = vadd.f32 %v1363, %v1000
        %v1492 = vadd.f32 %v1364, %v1000
        %v1493 = vadd.f32 %v1365, %v1000
        %v1494 = vadd.f32 %v1366, %v1000
        %v1495 = vadd.f32 %v1367, %v1000
        %v1496 = vadd.f32 %v1368, %v1000
        %v1497 = vadd.f32 %v1369, %v1000
        %v1498 = vadd.f32 %v1370, %v1000
        %v1499 = vadd.f32 %v1371, %v1000
        %v1500 = vadd.f32 %v1372, %v1000
        %v1501 = vadd.f32 %v1373, %v1000
        %v1502 = vadd.f32 %v1374, %v1000
        %v1503 = vadd.f32 %v1375, %v1000
        %v1504 = vadd.f32 %v1376, %v1000
        %v1505 = vadd.f32 %v1377, %v1000
        %v1506 = vadd.f32 %v1378, %v1000
        %v1507 = vadd.f32 %v1379, %v1000
        %v1508 = vadd.f32 %v1380, %v1000
        %v1509 = vadd.f32 %v1381, %v1000
        %v1510 = vadd.f32 %v1382, %v1000
        %v1511 = vadd.f32 %v1383, %v1000
        %v1512 = vadd.f32 %v1384, %v1000
        %1513 = vst [vmem:[%s199] sm:$0xff] %v1385
        %1514 = vst [vmem:[%s199 + $0x8] sm:$0xff] %v1386
        %1515 = vst [vmem:[%s199 + $0x10] sm:$0xff] %v1387
        %1516 = vst [vmem:[%s199 + $0x18] sm:$0xff] %v1388
        %1517 = vst [vmem:[%s199 + $0x20] sm:$0xff] %v1389
        %1518 = vst [vmem:[%s199 + $0x28] sm:$0xff] %v1390
        %1519 = vst [vmem:[%s199 + $0x30] sm:$0xff] %v1391
        %1520 = vst [vmem:[%s199 + $0x38] sm:$0xff] %v1392
        %1521 = vst [vmem:[%s199 + $0x40] sm:$0xff] %v1393
        %1522 = vst [vmem:[%s199 + $0x48] sm:$0xff] %v1394
        %1523 = vst [vmem:[%s199 + $0x50] sm:$0xff] %v1395
        %1524 = vst [vmem:[%s199 + $0x58] sm:$0xff] %v1396
        %1525 = vst [vmem:[%s199 + $0x60] sm:$0xff] %v1397
        %1526 = vst [vmem:[%s199 + $0x68] sm:$0xff] %v1398
        %1527 = vst [vmem:[%s199 + $0x70] sm:$0xff] %v1399
        %1528 = vst [vmem:[%s199 + $0x78] sm:$0xff] %v1400
        %1529 = vst [vmem:[%s199 + $0x80] sm:$0xff] %v1401
        %1530 = vst [vmem:[%s199 + $0x88] sm:$0xff] %v1402
        %1531 = vst [vmem:[%s199 + $0x90] sm:$0xff] %v1403
        %1532 = vst [vmem:[%s199 + $0x98] sm:$0xff] %v1404
        %1533 = vst [vmem:[%s199 + $0xa0] sm:$0xff] %v1405
        %1534 = vst [vmem:[%s199 + $0xa8] sm:$0xff] %v1406
        %1535 = vst [vmem:[%s199 + $0xb0] sm:$0xff] %v1407
        %1536 = vst [vmem:[%s199 + $0xb8] sm:$0xff] %v1408
        %1537 = vst [vmem:[%s199 + $0xc0] sm:$0xff] %v1409
        %1538 = vst [vmem:[%s199 + $0xc8] sm:$0xff] %v1410
        %1539 = vst [vmem:[%s199 + $0xd0] sm:$0xff] %v1411
        %1540 = vst [vmem:[%s199 + $0xd8] sm:$0xff] %v1412
        %1541 = vst [vmem:[%s199 + $0xe0] sm:$0xff] %v1413
        %1542 = vst [vmem:[%s199 + $0xe8] sm:$0xff] %v1414
        %1543 = vst [vmem:[%s199 + $0xf0] sm:$0xff] %v1415
        %1544 = vst [vmem:[%s199 + $0xf8] sm:$0xff] %v1416
        %1545 = vst [vmem:[%s199 + $0x100] sm:$0xff] %v1417
        %1546 = vst [vmem:[%s199 + $0x108] sm:$0xff] %v1418
        %1547 = vst [vmem:[%s199 + $0x110] sm:$0xff] %v1419
        %1548 = vst [vmem:[%s199 + $0x118] sm:$0xff] %v1420
        %1549 = vst [vmem:[%s199 + $0x120] sm:$0xff] %v1421
        %1550 = vst [vmem:[%s199 + $0x128] sm:$0xff] %v1422
        %1551 = vst [vmem:[%s199 + $0x130] sm:$0xff] %v1423
        %1552 = vst [vmem:[%s199 + $0x138] sm:$0xff] %v1424
        %1553 = vst [vmem:[%s199 + $0x140] sm:$0xff] %v1425
        %1554 = vst [vmem:[%s199 + $0x148] sm:$0xff] %v1426
        %1555 = vst [vmem:[%s199 + $0x150] sm:$0xff] %v1427
        %1556 = vst [vmem:[%s199 + $0x158] sm:$0xff] %v1428
        %1557 = vst [vmem:[%s199 + $0x160] sm:$0xff] %v1429
        %1558 = vst [vmem:[%s199 + $0x168] sm:$0xff] %v1430
        %1559 = vst [vmem:[%s199 + $0x170] sm:$0xff] %v1431
        %1560 = vst [vmem:[%s199 + $0x178] sm:$0xff] %v1432
        %1561 = vst [vmem:[%s199 + $0x180] sm:$0xff] %v1433
        %1562 = vst [vmem:[%s199 + $0x188] sm:$0xff] %v1434
        %1563 = vst [vmem:[%s199 + $0x190] sm:$0xff] %v1435
        %1564 = vst [vmem:[%s199 + $0x198] sm:$0xff] %v1436
        %1565 = vst [vmem:[%s199 + $0x1a0] sm:$0xff] %v1437
        %1566 = vst [vmem:[%s199 + $0x1a8] sm:$0xff] %v1438
        %1567 = vst [vmem:[%s199 + $0x1b0] sm:$0xff] %v1439
        %1568 = vst [vmem:[%s199 + $0x1b8] sm:$0xff] %v1440
        %1569 = vst [vmem:[%s199 + $0x1c0] sm:$0xff] %v1441
        %1570 = vst [vmem:[%s199 + $0x1c8] sm:$0xff] %v1442
        %1571 = vst [vmem:[%s199 + $0x1d0] sm:$0xff] %v1443
        %1572 = vst [vmem:[%s199 + $0x1d8] sm:$0xff] %v1444
        %1573 = vst [vmem:[%s199 + $0x1e0] sm:$0xff] %v1445
        %1574 = vst [vmem:[%s199 + $0x1e8] sm:$0xff] %v1446
        %1575 = vst [vmem:[%s199 + $0x1f0] sm:$0xff] %v1447
        %1576 = vst [vmem:[%s199 + $0x1f8] sm:$0xff] %v1448
        %1577 = vst [vmem:[%s199 + $0x200] sm:$0xff] %v1449
        %1578 = vst [vmem:[%s199 + $0x208] sm:$0xff] %v1450
        %1579 = vst [vmem:[%s199 + $0x210] sm:$0xff] %v1451
        %1580 = vst [vmem:[%s199 + $0x218] sm:$0xff] %v1452
        %1581 = vst [vmem:[%s199 + $0x220] sm:$0xff] %v1453
        %1582 = vst [vmem:[%s199 + $0x228] sm:$0xff] %v1454
        %1583 = vst [vmem:[%s199 + $0x230] sm:$0xff] %v1455
        %1584 = vst [vmem:[%s199 + $0x238] sm:$0xff] %v1456
        %1585 = vst [vmem:[%s199 + $0x240] sm:$0xff] %v1457
        %1586 = vst [vmem:[%s199 + $0x248] sm:$0xff] %v1458
        %1587 = vst [vmem:[%s199 + $0x250] sm:$0xff] %v1459
        %1588 = vst [vmem:[%s199 + $0x258] sm:$0xff] %v1460
        %1589 = vst [vmem:[%s199 + $0x260] sm:$0xff] %v1461
        %1590 = vst [vmem:[%s199 + $0x268] sm:$0xff] %v1462
        %1591 = vst [vmem:[%s199 + $0x270] sm:$0xff] %v1463
        %1592 = vst [vmem:[%s199 + $0x278] sm:$0xff] %v1464
        %1593 = vst [vmem:[%s199 + $0x280] sm:$0xff] %v1465
        %1594 = vst [vmem:[%s199 + $0x288] sm:$0xff] %v1466
        %1595 = vst [vmem:[%s199 + $0x290] sm:$0xff] %v1467
        %1596 = vst [vmem:[%s199 + $0x298] sm:$0xff] %v1468
        %1597 = vst [vmem:[%s199 + $0x2a0] sm:$0xff] %v1469
        %1598 = vst [vmem:[%s199 + $0x2a8] sm:$0xff] %v1470
        %1599 = vst [vmem:[%s199 + $0x2b0] sm:$0xff] %v1471
        %1600 = vst [vmem:[%s199 + $0x2b8] sm:$0xff] %v1472
        %1601 = vst [vmem:[%s199 + $0x2c0] sm:$0xff] %v1473
        %1602 = vst [vmem:[%s199 + $0x2c8] sm:$0xff] %v1474
        %1603 = vst [vmem:[%s199 + $0x2d0] sm:$0xff] %v1475
        %1604 = vst [vmem:[%s199 + $0x2d8] sm:$0xff] %v1476
        %1605 = vst [vmem:[%s199 + $0x2e0] sm:$0xff] %v1477
        %1606 = vst [vmem:[%s199 + $0x2e8] sm:$0xff] %v1478
        %1607 = vst [vmem:[%s199 + $0x2f0] sm:$0xff] %v1479
        %1608 = vst [vmem:[%s199 + $0x2f8] sm:$0xff] %v1480
        %1609 = vst [vmem:[%s199 + $0x300] sm:$0xff] %v1481
        %1610 = vst [vmem:[%s199 + $0x308] sm:$0xff] %v1482
        %1611 = vst [vmem:[%s199 + $0x310] sm:$0xff] %v1483
        %1612 = vst [vmem:[%s199 + $0x318] sm:$0xff] %v1484
        %1613 = vst [vmem:[%s199 + $0x320] sm:$0xff] %v1485
        %1614 = vst [vmem:[%s199 + $0x328] sm:$0xff] %v1486
        %1615 = vst [vmem:[%s199 + $0x330] sm:$0xff] %v1487
        %1616 = vst [vmem:[%s199 + $0x338] sm:$0xff] %v1488
        %1617 = vst [vmem:[%s199 + $0x340] sm:$0xff] %v1489
        %1618 = vst [vmem:[%s199 + $0x348] sm:$0xff] %v1490
        %1619 = vst [vmem:[%s199 + $0x350] sm:$0xff] %v1491
        %1620 = vst [vmem:[%s199 + $0x358] sm:$0xff] %v1492
        %1621 = vst [vmem:[%s199 + $0x360] sm:$0xff] %v1493
        %1622 = vst [vmem:[%s199 + $0x368] sm:$0xff] %v1494
        %1623 = vst [vmem:[%s199 + $0x370] sm:$0xff] %v1495
        %1624 = vst [vmem:[%s199 + $0x378] sm:$0xff] %v1496
        %1625 = vst [vmem:[%s199 + $0x380] sm:$0xff] %v1497
        %1626 = vst [vmem:[%s199 + $0x388] sm:$0xff] %v1498
        %1627 = vst [vmem:[%s199 + $0x390] sm:$0xff] %v1499
        %1628 = vst [vmem:[%s199 + $0x398] sm:$0xff] %v1500
        %1629 = vst [vmem:[%s199 + $0x3a0] sm:$0xff] %v1501
        %1630 = vst [vmem:[%s199 + $0x3a8] sm:$0xff] %v1502
        %1631 = vst [vmem:[%s199 + $0x3b0] sm:$0xff] %v1503
        %1632 = vst [vmem:[%s199 + $0x3b8] sm:$0xff] %v1504
        %1633 = vst [vmem:[%s199 + $0x3c0] sm:$0xff] %v1505
        %1634 = vst [vmem:[%s199 + $0x3c8] sm:$0xff] %v1506
        %1635 = vst [vmem:[%s199 + $0x3d0] sm:$0xff] %v1507
        %1636 = vst [vmem:[%s199 + $0x3d8] sm:$0xff] %v1508
        %1637 = vst [vmem:[%s199 + $0x3e0] sm:$0xff] %v1509
        %1638 = vst [vmem:[%s199 + $0x3e8] sm:$0xff] %v1510
        %1639 = vst [vmem:[%s199 + $0x3f0] sm:$0xff] %v1511
        %1640 = vst [vmem:[%s199 + $0x3f8] sm:$0xff] %v1512
        %s1641 = smul.u32 128, %s16
        %p1642 = scmp.lt.s32.totalorder %s1641, 255
        %s1643 = scalar_select %p1642, %s1641, 255
        %s1644 = smul.addr %s1643, 8
        %s1645 = scalar_lea.vmem %s3, %s1644
        // Predicated region
        $region41: #{linear_regression_forward.1} parent=31 // pred_check
          %p1646 = pneg %p102
        $region42: #{linear_regression_forward.1} parent=31 // pred_check_branch
          %1648 = sbr.rel (%p1646) target = $region44
        $region43: #{linear_regression_forward.1} parent=31 // pred_region
          %s1649 = smul.u32 128, %s16
        $region44: #{linear_regression_forward.1} parent=31 // pred_fallthru
          _
      $region32: #{linear_regression_forward.1} parent=5 // pred_fallthru
        _
      %p1650 = scmp.le.s32.totalorder 2, %s11
      // Predicated region
      $region45: #{linear_regression_forward.1} parent=5 // pred_check
        %p1651 = pneg %p1650
      $region46: #{linear_regression_forward.1} parent=5 // pred_check_branch
        %1653 = sbr.rel (%p1651) target = $region48
      $region47: #{linear_regression_forward.1} parent=5 // pred_region
        %s1654 = ssub.s32 %s11, 2
        // Predicated region
        $region49: #{linear_regression_forward.1} parent=47 // pred_check
          %p1655 = pneg %p108
        $region50: #{linear_regression_forward.1} parent=47 // pred_check_branch
          %1657 = sbr.rel (%p1655) target = $region52
        $region51: #{linear_regression_forward.1} parent=47 // pred_region
          %s1658 = smul.u32 128, %s17
          %p1659 = scmp.lt.s32.totalorder %s1658, 255
          %s1660 = scalar_select %p1659, %s1658, 255
          %s1661 = smul.addr %s1660, 8
          %s1662 = scalar_lea.vmem %s3, %s1661
        $region52: #{linear_regression_forward.1} parent=47 // pred_fallthru
          _
      $region48: #{linear_regression_forward.1} parent=5 // pred_fallthru
        _
    $region6: #{linear_regression_forward.1} parent=1 // loop_footer
      %s15 = sadd.s32 1, %s11
    $region7: #{linear_regression_forward.1} parent=1 // loop_footer_branch
      %10 = sbr.rel target = $region3
    $region8: #{linear_regression_forward.1} parent=1 // loop_exit
      _
    %1663 = vsyncpa [#allocation3], 1
    %s1664 = scalar_lea.sflag [#allocation3], 1
    %1665 = vsyncpa %s1664, 1
    %1666 = vsyncpa [#allocation5], 1

</llo_original>
